<compile_context>
chip_gen: v5e
topology: v5e:2x2
jax: 0.10.0
libtpu: 0.0.40
codegen_flags: <defaults>
</compile_context>

<pallas_src>
import functools

import jax
import jax.numpy as jnp
from jax.experimental import pallas as pl
from jax.experimental.pallas import tpu as pltpu


def _wavenet_kernel(x_ref, wfg0_ref, wfg_ref, wrs_ref, o_ref, *,
                    blocks, layers, kernel_size, dilation_factor,
                    channels, time_len):
    """One batch tile per program.  x_ref: (1, BB*T) single-channel signal."""
    C, K, T = channels, kernel_size, time_len
    L = blocks * layers
    BT = x_ref.shape[-1]
    cdt = wfg_ref.dtype                       # MXU operand dtype (f32 or bf16)

    x_in = x_ref[...].astype(jnp.float32)     # (1, BT) raw signal
    ones_row = jnp.ones((1, BT), jnp.float32)

    # Per-sequence local time along the lane axis (batch-major, time-minor).
    local_t = jax.lax.broadcasted_iota(jnp.int32, (1, BT), 1) % T

    # Hoisted causal masks: one per distinct offset (dilation resets per
    # block so offsets repeat every `layers` layers).  Offsets >= T give an
    # all-zero mask, which is exactly the causal zero-padding semantics.
    offsets = sorted({(K - 1 - k) * (dilation_factor ** j)
                      for j in range(layers) for k in range(K - 1)})
    mask1 = {off: (local_t >= off).astype(jnp.float32) for off in offsets}
    maskC = {off: jnp.broadcast_to(mask1[off], (C, BT)) for off in offsets}

    def taps_of(src, d, masks):
        taps = []
        for k in range(K):
            off = (K - 1 - k) * d
            if off == 0:
                taps.append(src)
            else:
                taps.append(pltpu.roll(src, off % BT, 1) * masks[off])
        return taps

    acc = jnp.zeros((1, BT), jnp.float32)     # running skip mix (incl. bmix)
    x = x_in                                  # residual stream (C, BT) after layer 0
    for ell in range(L):                      # unrolled at trace time
        d = dilation_factor ** (ell % layers)
        if ell == 0:
            # Layer 0 consumes the raw 1-channel signal: (K+1, BT) tap slab.
            xs = jnp.concatenate(taps_of(x_in, d, mask1) + [ones_row], axis=0)
            w = wfg0_ref[...]                 # (2C, K+1), bias folded in
        else:
            # (K*C+1, BT) shifted-tap slab built fully in registers.
            xs = jnp.concatenate(taps_of(x, d, maskC) + [ones_row], axis=0)
            w = wfg_ref[ell - 1]              # (2C, K*C+1), bias folded in

        # Fused dilated conv: filter + gate branches (and bias) in one push.
        zfg = jnp.dot(w, xs.astype(cdt), preferred_element_type=jnp.float32)
        gated = jnp.tanh(zfg[:C]) * jax.nn.sigmoid(zfg[C:])        # (C, BT)

        # Fused 1x1 residual conv + skip-mix row (+ biases) in one matmul.
        ga = jnp.concatenate([gated, ones_row], axis=0)            # (C+1, BT)
        rs = jnp.dot(wrs_ref[ell], ga.astype(cdt),
                     preferred_element_type=jnp.float32)           # (C+1, BT)
        x = rs[:C] if ell == 0 else rs[:C] + x                     # residual
        acc = acc + rs[C:C + 1]                                    # skip mix

    o_ref[...] = acc                          # (1, BT) lane-dense store


def make_params(key, *, blocks, layers, channels, kernel_size):
    """Raw parameters (layer 0 natively has in_channels=1)."""
    C, K = channels, kernel_size
    L = blocks * layers
    ks = jax.random.split(key, 10)
    s = 0.3
    return dict(
        wf0=s * jax.random.normal(ks[0], (K, 1, C), jnp.float32),   # [k,in,out]
        wg0=s * jax.random.normal(ks[1], (K, 1, C), jnp.float32),
        wf=s * jax.random.normal(ks[2], (L - 1, K, C, C), jnp.float32),
        wg=s * jax.random.normal(ks[3], (L - 1, K, C, C), jnp.float32),
        bf=s * jax.random.normal(ks[4], (L, C), jnp.float32),
        bg=s * jax.random.normal(ks[5], (L, C), jnp.float32),
        wres=s * jax.random.normal(ks[6], (L, C, C), jnp.float32),  # [in,out]
        bres=s * jax.random.normal(ks[7], (L, C), jnp.float32),
        wmix=s * jax.random.normal(ks[8], (L, C), jnp.float32),     # final 1x1
        bmix=s * jax.random.normal(ks[9], (), jnp.float32),
    )


def pack_params(params, *, channels, kernel_size, compute_dtype):
    """Pack raw params into (out_ch, contraction) layout with folded biases."""
    C, K = channels, kernel_size
    wf, wg = params["wf"], params["wg"]                 # (L-1, K, C_in, C_out)
    L = wf.shape[0] + 1

    # Layer 0: (2C, K+1)  [filter rows; gate rows], bias as last column.
    wf0 = jnp.transpose(params["wf0"][:, 0, :], (1, 0))             # (C, K)
    wg0 = jnp.transpose(params["wg0"][:, 0, :], (1, 0))             # (C, K)
    wfg0 = jnp.concatenate(
        [jnp.concatenate([wf0, params["bf"][0][:, None]], axis=1),
         jnp.concatenate([wg0, params["bg"][0][:, None]], axis=1)], axis=0)

    # Layers 1..L-1: (L-1, 2C, K*C+1), bias as last column.
    wf_t = jnp.transpose(wf, (0, 3, 1, 2)).reshape(L - 1, C, K * C)
    wg_t = jnp.transpose(wg, (0, 3, 1, 2)).reshape(L - 1, C, K * C)
    wfg = jnp.concatenate(
        [jnp.concatenate([wf_t, params["bf"][1:, :, None]], axis=2),
         jnp.concatenate([wg_t, params["bg"][1:, :, None]], axis=2)], axis=1)

    # Fused residual + skip-mix: (L, C+1, C+1).  Rows 0..C-1 = res conv (bias
    # in last col), row C = skip mix row (final-conv bias folded into layer 0).
    wres_t = jnp.transpose(params["wres"], (0, 2, 1))               # (L, out, in)
    top = jnp.concatenate([wres_t, params["bres"][:, :, None]], axis=2)
    mix_bias = jnp.zeros((L, 1, 1), jnp.float32).at[0, 0, 0].set(params["bmix"])
    bottom = jnp.concatenate([params["wmix"][:, None, :], mix_bias], axis=2)
    wrs = jnp.concatenate([top, bottom], axis=1)

    return (wfg0.astype(compute_dtype), wfg.astype(compute_dtype),
            wrs.astype(compute_dtype))


def _pick_batch_tile(B, T, max_lanes=4096):
    """Largest divisor of B whose lane-stacked tile stays a modest width."""
    best = 1
    for bb in range(1, B + 1):
        if B % bb == 0 and bb * T <= max_lanes:
            best = bb
    return best


def _weight_spec(a):
    """Full-array, constant-index, single-buffered weight BlockSpec."""
    index_map = lambda i, _nd=a.ndim: (0,) * _nd
    try:
        return pl.BlockSpec(a.shape, index_map, pipeline_mode=pl.Buffered(1))
    except TypeError:  # older signature without pipeline_mode
        return pl.BlockSpec(a.shape, index_map)


def wavenet_forward(x_tbo, params, *, blocks, layers, channels, kernel_size,
                    dilation_factor, compute_dtype=None, batch_tile=None):
    T, B, one = x_tbo.shape
    assert one == 1
    assert blocks * layers >= 2
    C, K = channels, kernel_size
    if compute_dtype is None:
        # Small C is EUP-bound (tanh/sigmoid): bf16 operands buy nothing and
        # just add casts (and v5e has no bf16 VPU/EUP).  Enable for large C.
        compute_dtype = jnp.bfloat16 if C >= 64 else jnp.float32

    # Glue: (T, B, 1) -> (B, T) -> batch tiles stacked along the lane axis.
    x_bt = jnp.transpose(x_tbo[:, :, 0], (1, 0)).astype(jnp.float32)   # (B, T)
    BB = batch_tile if batch_tile is not None else _pick_batch_tile(B, T)
    assert B % BB == 0
    NB = B // BB
    BT = BB * T
    x_tiles = x_bt.reshape(NB, 1, BT)          # single channel: no zero-pad DMA

    wfg0, wfg, wrs = pack_params(params, channels=C, kernel_size=K,
                                 compute_dtype=compute_dtype)

    kernel = functools.partial(
        _wavenet_kernel, blocks=blocks, layers=layers, kernel_size=K,
        dilation_factor=dilation_factor, channels=C, time_len=T)

    # Generation-aware VMEM budget (<= 3/4 of physical; ~48 MiB on v7x).
    try:
        phys_vmem = pltpu.get_tpu_info().vmem_capacity_bytes
    except Exception:
        phys_vmem = 64 * 1024 * 1024
    vmem_limit = min((phys_vmem * 3) // 4, 100 * 1024 * 1024)

    out = pl.pallas_call(
        kernel,
        out_shape=jax.ShapeDtypeStruct((NB, 1, BT), jnp.float32),
        grid=(NB,),
        in_specs=[pl.BlockSpec((None, 1, BT), lambda i: (i, 0, 0)),
                  _weight_spec(wfg0), _weight_spec(wfg), _weight_spec(wrs)],
        out_specs=pl.BlockSpec((None, 1, BT), lambda i: (i, 0, 0)),
        compiler_params=pltpu.CompilerParams(
            dimension_semantics=("parallel",),
            vmem_limit_bytes=int(vmem_limit)),
    )(x_tiles, wfg0, wfg, wrs)

    # (NB, 1, BB*T) -> (B, T) -> (T, B, 1): matches torch's final permute.
    y_bt = out.reshape(B, T)
    return jnp.transpose(y_bt, (1, 0))[:, :, None]


def wavenet_reference(x_tbo, params, *, blocks, layers, channels, kernel_size,
                      dilation_factor):
    """Pure-JAX reference with identical semantics (exact f32 matmuls)."""
    hi = jax.lax.Precision.HIGHEST
    T, B, _ = x_tbo.shape
    C, K = channels, kernel_size
    x = jnp.transpose(x_tbo, (1, 0, 2)).astype(jnp.float32)     # (B, T, 1)
    acc = jnp.zeros((B, T, 1), jnp.float32)
    for ell in range(blocks * layers):
        d = dilation_factor ** (ell % layers)
        if ell == 0:
            wf_l, wg_l = params["wf0"], params["wg0"]           # (K, 1, C)
        else:
            wf_l, wg_l = params["wf"][ell - 1], params["wg"][ell - 1]
        zf = jnp.zeros((B, T, C), jnp.float32)
        zg = jnp.zeros((B, T, C), jnp.float32)
        for k in range(K):
            off = (K - 1 - k) * d
            xs = jnp.pad(x, ((0, 0), (off, 0), (0, 0)))[:, :T, :]
            zf = zf + jnp.einsum("btc,co->bto", xs, wf_l[k], precision=hi)
            zg = zg + jnp.einsum("btc,co->bto", xs, wg_l[k], precision=hi)
        zf = zf + params["bf"][ell][None, None]
        zg = zg + params["bg"][ell][None, None]
        g = jnp.tanh(zf) * jax.nn.sigmoid(zg)
        res = jnp.einsum("btc,co->bto", g, params["wres"][ell], precision=hi) \
            + params["bres"][ell][None, None]
        x = res if ell == 0 else res + x
        acc = acc + jnp.einsum("btc,c->bt", g, params["wmix"][ell],
                               precision=hi)[..., None]
    out = acc + params["bmix"]
    return jnp.transpose(out, (1, 0, 2))


if __name__ == "__main__":
    # Small, module-consistent config (defaults scaled down for the demo).
    blocks, layers, channels, kernel_size, dilation = 2, 4, 8, 3, 2
    T, B = 128, 2     # time x batch x 1 channel; lanes per program = B*T = 256

    key = jax.random.PRNGKey(0)
    kx, kp = jax.random.split(key)
    x = jax.random.normal(kx, (T, B, 1), jnp.float32)
    params = make_params(kp, blocks=blocks, layers=layers,
                         channels=channels, kernel_size=kernel_size)

    y_ref = wavenet_reference(x, params, blocks=blocks, layers=layers,
                              channels=channels, kernel_size=kernel_size,
                              dilation_factor=dilation)

    # f32 path, whole batch lane-stacked into one program.
    y = wavenet_forward(x, params, blocks=blocks, layers=layers,
                        channels=channels, kernel_size=kernel_size,
                        dilation_factor=dilation)
    y = jax.block_until_ready(y)
    assert y.shape == (T, B, 1)
    err = float(jnp.max(jnp.abs(y - y_ref)))
    assert err < 1e-3, f"f32 mismatch vs reference: max abs err = {err}"

    # Batch-tiled grid path (one batch element per program) must also match.
    y_tiled = wavenet_forward(x, params, blocks=blocks, layers=layers,
                              channels=channels, kernel_size=kernel_size,
                              dilation_factor=dilation, batch_tile=1)
    y_tiled = jax.block_until_ready(y_tiled)
    err_t = float(jnp.max(jnp.abs(y_tiled - y_ref)))
    assert err_t < 1e-3, f"tiled-grid mismatch: max abs err = {err_t}"

    # bf16 MXU-operand fast path: accuracy-checked with a looser tolerance.
    y_bf16 = wavenet_forward(x, params, blocks=blocks, layers=layers,
                             channels=channels, kernel_size=kernel_size,
                             dilation_factor=dilation,
                             compute_dtype=jnp.bfloat16)
    y_bf16 = jax.block_until_ready(y_bf16)
    assert bool(jnp.all(jnp.isfinite(y_bf16)))
    err_bf16 = float(jnp.max(jnp.abs(y_bf16 - y_ref)))
    scale = max(1.0, float(jnp.max(jnp.abs(y_ref))))
    assert err_bf16 < 0.1 * scale, \
        f"bf16 mismatch vs reference: {err_bf16} (scale {scale})"

    print("KERNEL_OK")
</pallas_src>

<mosaic_0001>
module attributes {stable_mosaic.version = 11 : i64} {
  func.func @_wavenet_kernel(%arg0: i32, %arg1: memref<1x1x256xf32, #tpu.memory_space<vmem>>, %arg2: memref<16x4xf32, #tpu.memory_space<vmem>>, %arg3: memref<7x16x25xf32, #tpu.memory_space<vmem>>, %arg4: memref<8x9x9xf32, #tpu.memory_space<vmem>>, %arg5: memref<1x1x256xf32, #tpu.memory_space<vmem>>) attributes {dimension_semantics = [#tpu.dimension_semantics<parallel>], iteration_bounds = array<i64: 1>, scalar_prefetch = 0 : i64, scratch_operands = 0 : i64, tpu.core_type = #tpu.core_type<tc>, window_params = [{transform_indices = @transform_0, window_bounds = array<i64: 1, 1, 256>}, {pipeline_mode = #tpu.pipeline_mode<synchronous>, transform_indices = @transform_1, window_bounds = array<i64: 16, 4>}, {pipeline_mode = #tpu.pipeline_mode<synchronous>, transform_indices = @transform_2, window_bounds = array<i64: 7, 16, 25>}, {pipeline_mode = #tpu.pipeline_mode<synchronous>, transform_indices = @transform_3, window_bounds = array<i64: 8, 9, 9>}, {transform_indices = @transform_4, window_bounds = array<i64: 1, 1, 256>}]} {
    %c0 = arith.constant 0 : index
    %c0_0 = arith.constant 0 : index
    %c0_1 = arith.constant 0 : index
    %0 = vector.load %arg1[%c0, %c0_0, %c0_1] : memref<1x1x256xf32, #tpu.memory_space<vmem>>, vector<1x1x256xf32>
    %1 = vector.shape_cast %0 : vector<1x1x256xf32> to vector<1x256xf32>
    %cst = arith.constant 1.000000e+00 : f32
    %2 = vector.broadcast %cst : f32 to vector<1x256xf32>
    %3 = tpu.iota {dimensions = array<i32: 1>} : vector<1x256xi32>
    %c128_i32 = arith.constant 128 : i32
    %c0_i32 = arith.constant 0 : i32
    %4 = arith.cmpi eq, %c128_i32, %c0_i32 : i32
    %c1_i32 = arith.constant 1 : i32
    %5 = arith.select %4, %c1_i32, %c128_i32 : i32
    %6 = vector.broadcast %5 : i32 to vector<1x256xi32>
    %7 = arith.remsi %3, %6 : vector<1x256xi32>
    %c0_i32_2 = arith.constant 0 : i32
    %8 = vector.broadcast %c0_i32_2 : i32 to vector<1x256xi32>
    %9 = arith.cmpi ne, %7, %8 : vector<1x256xi32>
    %c0_i32_3 = arith.constant 0 : i32
    %10 = vector.broadcast %c0_i32_3 : i32 to vector<1x256xi32>
    %11 = arith.cmpi slt, %7, %10 : vector<1x256xi32>
    %c0_i32_4 = arith.constant 0 : i32
    %12 = arith.cmpi slt, %5, %c0_i32_4 : i32
    %13 = vector.broadcast %12 : i1 to vector<1x256xi1>
    %14 = vector.broadcast %13 : vector<1x256xi1> to vector<1x256xi1>
    %15 = arith.xori %11, %14 : vector<1x256xi1>
    %16 = arith.andi %15, %9 : vector<1x256xi1>
    %17 = vector.broadcast %5 : i32 to vector<1x256xi32>
    %18 = arith.addi %7, %17 : vector<1x256xi32>
    %19 = arith.select %16, %18, %7 : vector<1x256xi1>, vector<1x256xi32>
    %c1_i32_5 = arith.constant 1 : i32
    %20 = vector.broadcast %c1_i32_5 : i32 to vector<1x256xi32>
    %21 = arith.cmpi sge, %19, %20 : vector<1x256xi32>
    %22 = arith.extui %21 : vector<1x256xi1> to vector<1x256xi32>
    %23 = arith.sitofp %22 : vector<1x256xi32> to vector<1x256xf32>
    %c2_i32 = arith.constant 2 : i32
    %24 = vector.broadcast %c2_i32 : i32 to vector<1x256xi32>
    %25 = arith.cmpi sge, %19, %24 : vector<1x256xi32>
    %26 = arith.extui %25 : vector<1x256xi1> to vector<1x256xi32>
    %27 = arith.sitofp %26 : vector<1x256xi32> to vector<1x256xf32>
    %c4_i32 = arith.constant 4 : i32
    %28 = vector.broadcast %c4_i32 : i32 to vector<1x256xi32>
    %29 = arith.cmpi sge, %19, %28 : vector<1x256xi32>
    %30 = arith.extui %29 : vector<1x256xi1> to vector<1x256xi32>
    %31 = arith.sitofp %30 : vector<1x256xi32> to vector<1x256xf32>
    %c8_i32 = arith.constant 8 : i32
    %32 = vector.broadcast %c8_i32 : i32 to vector<1x256xi32>
    %33 = arith.cmpi sge, %19, %32 : vector<1x256xi32>
    %34 = arith.extui %33 : vector<1x256xi1> to vector<1x256xi32>
    %35 = arith.sitofp %34 : vector<1x256xi32> to vector<1x256xf32>
    %c16_i32 = arith.constant 16 : i32
    %36 = vector.broadcast %c16_i32 : i32 to vector<1x256xi32>
    %37 = arith.cmpi sge, %19, %36 : vector<1x256xi32>
    %38 = arith.extui %37 : vector<1x256xi1> to vector<1x256xi32>
    %39 = arith.sitofp %38 : vector<1x256xi32> to vector<1x256xf32>
    %40 = vector.shape_cast %23 : vector<1x256xf32> to vector<1x256xf32>
    %41 = vector.broadcast %40 : vector<1x256xf32> to vector<8x256xf32>
    %42 = vector.shape_cast %27 : vector<1x256xf32> to vector<1x256xf32>
    %43 = vector.broadcast %42 : vector<1x256xf32> to vector<8x256xf32>
    %44 = vector.shape_cast %31 : vector<1x256xf32> to vector<1x256xf32>
    %45 = vector.broadcast %44 : vector<1x256xf32> to vector<8x256xf32>
    %46 = vector.shape_cast %35 : vector<1x256xf32> to vector<1x256xf32>
    %47 = vector.broadcast %46 : vector<1x256xf32> to vector<8x256xf32>
    %48 = vector.shape_cast %39 : vector<1x256xf32> to vector<1x256xf32>
    %49 = vector.broadcast %48 : vector<1x256xf32> to vector<8x256xf32>
    %cst_6 = arith.constant 0.000000e+00 : f32
    %50 = vector.broadcast %cst_6 : f32 to vector<1x256xf32>
    %c2_i32_7 = arith.constant 2 : i32
    %51 = tpu.dynamic_rotate %1 by %c2_i32_7 dim 1 : vector<1x256xf32>, i32 -> vector<1x256xf32>
    %52 = arith.mulf %51, %27 : vector<1x256xf32>
    %c1_i32_8 = arith.constant 1 : i32
    %53 = tpu.dynamic_rotate %1 by %c1_i32_8 dim 1 : vector<1x256xf32>, i32 -> vector<1x256xf32>
    %54 = arith.mulf %53, %23 : vector<1x256xf32>
    %55 = tpu.concatenate %52, %54, %1, %2 in 0 : vector<1x256xf32>, vector<1x256xf32>, vector<1x256xf32>, vector<1x256xf32> -> vector<4x256xf32>
    %c0_9 = arith.constant 0 : index
    %c0_10 = arith.constant 0 : index
    %56 = vector.load %arg2[%c0_9, %c0_10] : memref<16x4xf32, #tpu.memory_space<vmem>>, vector<16x4xf32>
    %cst_11 = arith.constant dense<0.000000e+00> : vector<16x256xf32>
    %57 = tpu.matmul %56, %55, %cst_11 {dimension_numbers = #tpu.dot_dimension_numbers<[1], [0], [0], [1], [0, 0, 1, 1], [], []>} : vector<16x4xf32>, vector<4x256xf32>, vector<16x256xf32> -> vector<16x256xf32>
    %58 = vector.extract_strided_slice %57 {offsets = [0, 0], sizes = [8, 256], strides = [1, 1]} : vector<16x256xf32> to vector<8x256xf32>
    %59 = math.tanh %58 : vector<8x256xf32>
    %60 = vector.extract_strided_slice %57 {offsets = [8, 0], sizes = [8, 256], strides = [1, 1]} : vector<16x256xf32> to vector<8x256xf32>
    %61 = arith.negf %60 : vector<8x256xf32>
    %62 = math.exp %61 : vector<8x256xf32>
    %cst_12 = arith.constant 1.000000e+00 : f32
    %63 = vector.broadcast %cst_12 : f32 to vector<8x256xf32>
    %64 = arith.addf %63, %62 : vector<8x256xf32>
    %65 = arith.divf %63, %64 : vector<8x256xf32>
    %66 = arith.mulf %59, %65 : vector<8x256xf32>
    %67 = tpu.concatenate %66, %2 in 0 : vector<8x256xf32>, vector<1x256xf32> -> vector<9x256xf32>
    %c0_13 = arith.constant 0 : index
    %c0_14 = arith.constant 0 : index
    %c0_15 = arith.constant 0 : index
    %68 = vector.load %arg4[%c0_13, %c0_14, %c0_15] : memref<8x9x9xf32, #tpu.memory_space<vmem>>, vector<1x9x9xf32>
    %69 = vector.shape_cast %68 : vector<1x9x9xf32> to vector<9x9xf32>
    %cst_16 = arith.constant dense<0.000000e+00> : vector<9x256xf32>
    %70 = tpu.matmul %69, %67, %cst_16 {dimension_numbers = #tpu.dot_dimension_numbers<[1], [0], [0], [1], [0, 0, 1, 1], [], []>} : vector<9x9xf32>, vector<9x256xf32>, vector<9x256xf32> -> vector<9x256xf32>
    %71 = vector.extract_strided_slice %70 {offsets = [0, 0], sizes = [8, 256], strides = [1, 1]} : vector<9x256xf32> to vector<8x256xf32>
    %72 = vector.extract_strided_slice %70 {offsets = [8, 0], sizes = [1, 256], strides = [1, 1]} : vector<9x256xf32> to vector<1x256xf32>
    %73 = arith.addf %50, %72 : vector<1x256xf32>
    %c4_i32_17 = arith.constant 4 : i32
    %74 = tpu.dynamic_rotate %71 by %c4_i32_17 dim 1 : vector<8x256xf32>, i32 -> vector<8x256xf32>
    %75 = arith.mulf %74, %45 : vector<8x256xf32>
    %c2_i32_18 = arith.constant 2 : i32
    %76 = tpu.dynamic_rotate %71 by %c2_i32_18 dim 1 : vector<8x256xf32>, i32 -> vector<8x256xf32>
    %77 = arith.mulf %76, %43 : vector<8x256xf32>
    %78 = tpu.concatenate %75, %77, %71, %2 in 0 : vector<8x256xf32>, vector<8x256xf32>, vector<8x256xf32>, vector<1x256xf32> -> vector<25x256xf32>
    %c0_19 = arith.constant 0 : index
    %c0_20 = arith.constant 0 : index
    %c0_21 = arith.constant 0 : index
    %79 = vector.load %arg3[%c0_19, %c0_20, %c0_21] : memref<7x16x25xf32, #tpu.memory_space<vmem>>, vector<1x16x25xf32>
    %80 = vector.shape_cast %79 : vector<1x16x25xf32> to vector<16x25xf32>
    %cst_22 = arith.constant dense<0.000000e+00> : vector<16x256xf32>
    %81 = tpu.matmul %80, %78, %cst_22 {dimension_numbers = #tpu.dot_dimension_numbers<[1], [0], [0], [1], [0, 0, 1, 1], [], []>} : vector<16x25xf32>, vector<25x256xf32>, vector<16x256xf32> -> vector<16x256xf32>
    %82 = vector.extract_strided_slice %81 {offsets = [0, 0], sizes = [8, 256], strides = [1, 1]} : vector<16x256xf32> to vector<8x256xf32>
    %83 = math.tanh %82 : vector<8x256xf32>
    %84 = vector.extract_strided_slice %81 {offsets = [8, 0], sizes = [8, 256], strides = [1, 1]} : vector<16x256xf32> to vector<8x256xf32>
    %85 = arith.negf %84 : vector<8x256xf32>
    %86 = math.exp %85 : vector<8x256xf32>
    %cst_23 = arith.constant 1.000000e+00 : f32
    %87 = vector.broadcast %cst_23 : f32 to vector<8x256xf32>
    %88 = arith.addf %87, %86 : vector<8x256xf32>
    %89 = arith.divf %87, %88 : vector<8x256xf32>
    %90 = arith.mulf %83, %89 : vector<8x256xf32>
    %91 = tpu.concatenate %90, %2 in 0 : vector<8x256xf32>, vector<1x256xf32> -> vector<9x256xf32>
    %c1 = arith.constant 1 : index
    %c0_24 = arith.constant 0 : index
    %c0_25 = arith.constant 0 : index
    %92 = vector.load %arg4[%c1, %c0_24, %c0_25] : memref<8x9x9xf32, #tpu.memory_space<vmem>>, vector<1x9x9xf32>
    %93 = vector.shape_cast %92 : vector<1x9x9xf32> to vector<9x9xf32>
    %cst_26 = arith.constant dense<0.000000e+00> : vector<9x256xf32>
    %94 = tpu.matmul %93, %91, %cst_26 {dimension_numbers = #tpu.dot_dimension_numbers<[1], [0], [0], [1], [0, 0, 1, 1], [], []>} : vector<9x9xf32>, vector<9x256xf32>, vector<9x256xf32> -> vector<9x256xf32>
    %95 = vector.extract_strided_slice %94 {offsets = [0, 0], sizes = [8, 256], strides = [1, 1]} : vector<9x256xf32> to vector<8x256xf32>
    %96 = arith.addf %95, %71 : vector<8x256xf32>
    %97 = vector.extract_strided_slice %94 {offsets = [8, 0], sizes = [1, 256], strides = [1, 1]} : vector<9x256xf32> to vector<1x256xf32>
    %98 = arith.addf %73, %97 : vector<1x256xf32>
    %c8_i32_27 = arith.constant 8 : i32
    %99 = tpu.dynamic_rotate %96 by %c8_i32_27 dim 1 : vector<8x256xf32>, i32 -> vector<8x256xf32>
    %100 = arith.mulf %99, %47 : vector<8x256xf32>
    %c4_i32_28 = arith.constant 4 : i32
    %101 = tpu.dynamic_rotate %96 by %c4_i32_28 dim 1 : vector<8x256xf32>, i32 -> vector<8x256xf32>
    %102 = arith.mulf %101, %45 : vector<8x256xf32>
    %103 = tpu.concatenate %100, %102, %96, %2 in 0 : vector<8x256xf32>, vector<8x256xf32>, vector<8x256xf32>, vector<1x256xf32> -> vector<25x256xf32>
    %c1_29 = arith.constant 1 : index
    %c0_30 = arith.constant 0 : index
    %c0_31 = arith.constant 0 : index
    %104 = vector.load %arg3[%c1_29, %c0_30, %c0_31] : memref<7x16x25xf32, #tpu.memory_space<vmem>>, vector<1x16x25xf32>
    %105 = vector.shape_cast %104 : vector<1x16x25xf32> to vector<16x25xf32>
    %cst_32 = arith.constant dense<0.000000e+00> : vector<16x256xf32>
    %106 = tpu.matmul %105, %103, %cst_32 {dimension_numbers = #tpu.dot_dimension_numbers<[1], [0], [0], [1], [0, 0, 1, 1], [], []>} : vector<16x25xf32>, vector<25x256xf32>, vector<16x256xf32> -> vector<16x256xf32>
    %107 = vector.extract_strided_slice %106 {offsets = [0, 0], sizes = [8, 256], strides = [1, 1]} : vector<16x256xf32> to vector<8x256xf32>
    %108 = math.tanh %107 : vector<8x256xf32>
    %109 = vector.extract_strided_slice %106 {offsets = [8, 0], sizes = [8, 256], strides = [1, 1]} : vector<16x256xf32> to vector<8x256xf32>
    %110 = arith.negf %109 : vector<8x256xf32>
    %111 = math.exp %110 : vector<8x256xf32>
    %cst_33 = arith.constant 1.000000e+00 : f32
    %112 = vector.broadcast %cst_33 : f32 to vector<8x256xf32>
    %113 = arith.addf %112, %111 : vector<8x256xf32>
    %114 = arith.divf %112, %113 : vector<8x256xf32>
    %115 = arith.mulf %108, %114 : vector<8x256xf32>
    %116 = tpu.concatenate %115, %2 in 0 : vector<8x256xf32>, vector<1x256xf32> -> vector<9x256xf32>
    %c2 = arith.constant 2 : index
    %c0_34 = arith.constant 0 : index
    %c0_35 = arith.constant 0 : index
    %117 = vector.load %arg4[%c2, %c0_34, %c0_35] : memref<8x9x9xf32, #tpu.memory_space<vmem>>, vector<1x9x9xf32>
    %118 = vector.shape_cast %117 : vector<1x9x9xf32> to vector<9x9xf32>
    %cst_36 = arith.constant dense<0.000000e+00> : vector<9x256xf32>
    %119 = tpu.matmul %118, %116, %cst_36 {dimension_numbers = #tpu.dot_dimension_numbers<[1], [0], [0], [1], [0, 0, 1, 1], [], []>} : vector<9x9xf32>, vector<9x256xf32>, vector<9x256xf32> -> vector<9x256xf32>
    %120 = vector.extract_strided_slice %119 {offsets = [0, 0], sizes = [8, 256], strides = [1, 1]} : vector<9x256xf32> to vector<8x256xf32>
    %121 = arith.addf %120, %96 : vector<8x256xf32>
    %122 = vector.extract_strided_slice %119 {offsets = [8, 0], sizes = [1, 256], strides = [1, 1]} : vector<9x256xf32> to vector<1x256xf32>
    %123 = arith.addf %98, %122 : vector<1x256xf32>
    %c16_i32_37 = arith.constant 16 : i32
    %124 = tpu.dynamic_rotate %121 by %c16_i32_37 dim 1 : vector<8x256xf32>, i32 -> vector<8x256xf32>
    %125 = arith.mulf %124, %49 : vector<8x256xf32>
    %c8_i32_38 = arith.constant 8 : i32
    %126 = tpu.dynamic_rotate %121 by %c8_i32_38 dim 1 : vector<8x256xf32>, i32 -> vector<8x256xf32>
    %127 = arith.mulf %126, %47 : vector<8x256xf32>
    %128 = tpu.concatenate %125, %127, %121, %2 in 0 : vector<8x256xf32>, vector<8x256xf32>, vector<8x256xf32>, vector<1x256xf32> -> vector<25x256xf32>
    %c2_39 = arith.constant 2 : index
    %c0_40 = arith.constant 0 : index
    %c0_41 = arith.constant 0 : index
    %129 = vector.load %arg3[%c2_39, %c0_40, %c0_41] : memref<7x16x25xf32, #tpu.memory_space<vmem>>, vector<1x16x25xf32>
    %130 = vector.shape_cast %129 : vector<1x16x25xf32> to vector<16x25xf32>
    %cst_42 = arith.constant dense<0.000000e+00> : vector<16x256xf32>
    %131 = tpu.matmul %130, %128, %cst_42 {dimension_numbers = #tpu.dot_dimension_numbers<[1], [0], [0], [1], [0, 0, 1, 1], [], []>} : vector<16x25xf32>, vector<25x256xf32>, vector<16x256xf32> -> vector<16x256xf32>
    %132 = vector.extract_strided_slice %131 {offsets = [0, 0], sizes = [8, 256], strides = [1, 1]} : vector<16x256xf32> to vector<8x256xf32>
    %133 = math.tanh %132 : vector<8x256xf32>
    %134 = vector.extract_strided_slice %131 {offsets = [8, 0], sizes = [8, 256], strides = [1, 1]} : vector<16x256xf32> to vector<8x256xf32>
    %135 = arith.negf %134 : vector<8x256xf32>
    %136 = math.exp %135 : vector<8x256xf32>
    %cst_43 = arith.constant 1.000000e+00 : f32
    %137 = vector.broadcast %cst_43 : f32 to vector<8x256xf32>
    %138 = arith.addf %137, %136 : vector<8x256xf32>
    %139 = arith.divf %137, %138 : vector<8x256xf32>
    %140 = arith.mulf %133, %139 : vector<8x256xf32>
    %141 = tpu.concatenate %140, %2 in 0 : vector<8x256xf32>, vector<1x256xf32> -> vector<9x256xf32>
    %c3 = arith.constant 3 : index
    %c0_44 = arith.constant 0 : index
    %c0_45 = arith.constant 0 : index
    %142 = vector.load %arg4[%c3, %c0_44, %c0_45] : memref<8x9x9xf32, #tpu.memory_space<vmem>>, vector<1x9x9xf32>
    %143 = vector.shape_cast %142 : vector<1x9x9xf32> to vector<9x9xf32>
    %cst_46 = arith.constant dense<0.000000e+00> : vector<9x256xf32>
    %144 = tpu.matmul %143, %141, %cst_46 {dimension_numbers = #tpu.dot_dimension_numbers<[1], [0], [0], [1], [0, 0, 1, 1], [], []>} : vector<9x9xf32>, vector<9x256xf32>, vector<9x256xf32> -> vector<9x256xf32>
    %145 = vector.extract_strided_slice %144 {offsets = [0, 0], sizes = [8, 256], strides = [1, 1]} : vector<9x256xf32> to vector<8x256xf32>
    %146 = arith.addf %145, %121 : vector<8x256xf32>
    %147 = vector.extract_strided_slice %144 {offsets = [8, 0], sizes = [1, 256], strides = [1, 1]} : vector<9x256xf32> to vector<1x256xf32>
    %148 = arith.addf %123, %147 : vector<1x256xf32>
    %c2_i32_47 = arith.constant 2 : i32
    %149 = tpu.dynamic_rotate %146 by %c2_i32_47 dim 1 : vector<8x256xf32>, i32 -> vector<8x256xf32>
    %150 = arith.mulf %149, %43 : vector<8x256xf32>
    %c1_i32_48 = arith.constant 1 : i32
    %151 = tpu.dynamic_rotate %146 by %c1_i32_48 dim 1 : vector<8x256xf32>, i32 -> vector<8x256xf32>
    %152 = arith.mulf %151, %41 : vector<8x256xf32>
    %153 = tpu.concatenate %150, %152, %146, %2 in 0 : vector<8x256xf32>, vector<8x256xf32>, vector<8x256xf32>, vector<1x256xf32> -> vector<25x256xf32>
    %c3_49 = arith.constant 3 : index
    %c0_50 = arith.constant 0 : index
    %c0_51 = arith.constant 0 : index
    %154 = vector.load %arg3[%c3_49, %c0_50, %c0_51] : memref<7x16x25xf32, #tpu.memory_space<vmem>>, vector<1x16x25xf32>
    %155 = vector.shape_cast %154 : vector<1x16x25xf32> to vector<16x25xf32>
    %cst_52 = arith.constant dense<0.000000e+00> : vector<16x256xf32>
    %156 = tpu.matmul %155, %153, %cst_52 {dimension_numbers = #tpu.dot_dimension_numbers<[1], [0], [0], [1], [0, 0, 1, 1], [], []>} : vector<16x25xf32>, vector<25x256xf32>, vector<16x256xf32> -> vector<16x256xf32>
    %157 = vector.extract_strided_slice %156 {offsets = [0, 0], sizes = [8, 256], strides = [1, 1]} : vector<16x256xf32> to vector<8x256xf32>
    %158 = math.tanh %157 : vector<8x256xf32>
    %159 = vector.extract_strided_slice %156 {offsets = [8, 0], sizes = [8, 256], strides = [1, 1]} : vector<16x256xf32> to vector<8x256xf32>
    %160 = arith.negf %159 : vector<8x256xf32>
    %161 = math.exp %160 : vector<8x256xf32>
    %cst_53 = arith.constant 1.000000e+00 : f32
    %162 = vector.broadcast %cst_53 : f32 to vector<8x256xf32>
    %163 = arith.addf %162, %161 : vector<8x256xf32>
    %164 = arith.divf %162, %163 : vector<8x256xf32>
    %165 = arith.mulf %158, %164 : vector<8x256xf32>
    %166 = tpu.concatenate %165, %2 in 0 : vector<8x256xf32>, vector<1x256xf32> -> vector<9x256xf32>
    %c4 = arith.constant 4 : index
    %c0_54 = arith.constant 0 : index
    %c0_55 = arith.constant 0 : index
    %167 = vector.load %arg4[%c4, %c0_54, %c0_55] : memref<8x9x9xf32, #tpu.memory_space<vmem>>, vector<1x9x9xf32>
    %168 = vector.shape_cast %167 : vector<1x9x9xf32> to vector<9x9xf32>
    %cst_56 = arith.constant dense<0.000000e+00> : vector<9x256xf32>
    %169 = tpu.matmul %168, %166, %cst_56 {dimension_numbers = #tpu.dot_dimension_numbers<[1], [0], [0], [1], [0, 0, 1, 1], [], []>} : vector<9x9xf32>, vector<9x256xf32>, vector<9x256xf32> -> vector<9x256xf32>
    %170 = vector.extract_strided_slice %169 {offsets = [0, 0], sizes = [8, 256], strides = [1, 1]} : vector<9x256xf32> to vector<8x256xf32>
    %171 = arith.addf %170, %146 : vector<8x256xf32>
    %172 = vector.extract_strided_slice %169 {offsets = [8, 0], sizes = [1, 256], strides = [1, 1]} : vector<9x256xf32> to vector<1x256xf32>
    %173 = arith.addf %148, %172 : vector<1x256xf32>
    %c4_i32_57 = arith.constant 4 : i32
    %174 = tpu.dynamic_rotate %171 by %c4_i32_57 dim 1 : vector<8x256xf32>, i32 -> vector<8x256xf32>
    %175 = arith.mulf %174, %45 : vector<8x256xf32>
    %c2_i32_58 = arith.constant 2 : i32
    %176 = tpu.dynamic_rotate %171 by %c2_i32_58 dim 1 : vector<8x256xf32>, i32 -> vector<8x256xf32>
    %177 = arith.mulf %176, %43 : vector<8x256xf32>
    %178 = tpu.concatenate %175, %177, %171, %2 in 0 : vector<8x256xf32>, vector<8x256xf32>, vector<8x256xf32>, vector<1x256xf32> -> vector<25x256xf32>
    %c4_59 = arith.constant 4 : index
    %c0_60 = arith.constant 0 : index
    %c0_61 = arith.constant 0 : index
    %179 = vector.load %arg3[%c4_59, %c0_60, %c0_61] : memref<7x16x25xf32, #tpu.memory_space<vmem>>, vector<1x16x25xf32>
    %180 = vector.shape_cast %179 : vector<1x16x25xf32> to vector<16x25xf32>
    %cst_62 = arith.constant dense<0.000000e+00> : vector<16x256xf32>
    %181 = tpu.matmul %180, %178, %cst_62 {dimension_numbers = #tpu.dot_dimension_numbers<[1], [0], [0], [1], [0, 0, 1, 1], [], []>} : vector<16x25xf32>, vector<25x256xf32>, vector<16x256xf32> -> vector<16x256xf32>
    %182 = vector.extract_strided_slice %181 {offsets = [0, 0], sizes = [8, 256], strides = [1, 1]} : vector<16x256xf32> to vector<8x256xf32>
    %183 = math.tanh %182 : vector<8x256xf32>
    %184 = vector.extract_strided_slice %181 {offsets = [8, 0], sizes = [8, 256], strides = [1, 1]} : vector<16x256xf32> to vector<8x256xf32>
    %185 = arith.negf %184 : vector<8x256xf32>
    %186 = math.exp %185 : vector<8x256xf32>
    %cst_63 = arith.constant 1.000000e+00 : f32
    %187 = vector.broadcast %cst_63 : f32 to vector<8x256xf32>
    %188 = arith.addf %187, %186 : vector<8x256xf32>
    %189 = arith.divf %187, %188 : vector<8x256xf32>
    %190 = arith.mulf %183, %189 : vector<8x256xf32>
    %191 = tpu.concatenate %190, %2 in 0 : vector<8x256xf32>, vector<1x256xf32> -> vector<9x256xf32>
    %c5 = arith.constant 5 : index
    %c0_64 = arith.constant 0 : index
    %c0_65 = arith.constant 0 : index
    %192 = vector.load %arg4[%c5, %c0_64, %c0_65] : memref<8x9x9xf32, #tpu.memory_space<vmem>>, vector<1x9x9xf32>
    %193 = vector.shape_cast %192 : vector<1x9x9xf32> to vector<9x9xf32>
    %cst_66 = arith.constant dense<0.000000e+00> : vector<9x256xf32>
    %194 = tpu.matmul %193, %191, %cst_66 {dimension_numbers = #tpu.dot_dimension_numbers<[1], [0], [0], [1], [0, 0, 1, 1], [], []>} : vector<9x9xf32>, vector<9x256xf32>, vector<9x256xf32> -> vector<9x256xf32>
    %195 = vector.extract_strided_slice %194 {offsets = [0, 0], sizes = [8, 256], strides = [1, 1]} : vector<9x256xf32> to vector<8x256xf32>
    %196 = arith.addf %195, %171 : vector<8x256xf32>
    %197 = vector.extract_strided_slice %194 {offsets = [8, 0], sizes = [1, 256], strides = [1, 1]} : vector<9x256xf32> to vector<1x256xf32>
    %198 = arith.addf %173, %197 : vector<1x256xf32>
    %c8_i32_67 = arith.constant 8 : i32
    %199 = tpu.dynamic_rotate %196 by %c8_i32_67 dim 1 : vector<8x256xf32>, i32 -> vector<8x256xf32>
    %200 = arith.mulf %199, %47 : vector<8x256xf32>
    %c4_i32_68 = arith.constant 4 : i32
    %201 = tpu.dynamic_rotate %196 by %c4_i32_68 dim 1 : vector<8x256xf32>, i32 -> vector<8x256xf32>
    %202 = arith.mulf %201, %45 : vector<8x256xf32>
    %203 = tpu.concatenate %200, %202, %196, %2 in 0 : vector<8x256xf32>, vector<8x256xf32>, vector<8x256xf32>, vector<1x256xf32> -> vector<25x256xf32>
    %c5_69 = arith.constant 5 : index
    %c0_70 = arith.constant 0 : index
    %c0_71 = arith.constant 0 : index
    %204 = vector.load %arg3[%c5_69, %c0_70, %c0_71] : memref<7x16x25xf32, #tpu.memory_space<vmem>>, vector<1x16x25xf32>
    %205 = vector.shape_cast %204 : vector<1x16x25xf32> to vector<16x25xf32>
    %cst_72 = arith.constant dense<0.000000e+00> : vector<16x256xf32>
    %206 = tpu.matmul %205, %203, %cst_72 {dimension_numbers = #tpu.dot_dimension_numbers<[1], [0], [0], [1], [0, 0, 1, 1], [], []>} : vector<16x25xf32>, vector<25x256xf32>, vector<16x256xf32> -> vector<16x256xf32>
    %207 = vector.extract_strided_slice %206 {offsets = [0, 0], sizes = [8, 256], strides = [1, 1]} : vector<16x256xf32> to vector<8x256xf32>
    %208 = math.tanh %207 : vector<8x256xf32>
    %209 = vector.extract_strided_slice %206 {offsets = [8, 0], sizes = [8, 256], strides = [1, 1]} : vector<16x256xf32> to vector<8x256xf32>
    %210 = arith.negf %209 : vector<8x256xf32>
    %211 = math.exp %210 : vector<8x256xf32>
    %cst_73 = arith.constant 1.000000e+00 : f32
    %212 = vector.broadcast %cst_73 : f32 to vector<8x256xf32>
    %213 = arith.addf %212, %211 : vector<8x256xf32>
    %214 = arith.divf %212, %213 : vector<8x256xf32>
    %215 = arith.mulf %208, %214 : vector<8x256xf32>
    %216 = tpu.concatenate %215, %2 in 0 : vector<8x256xf32>, vector<1x256xf32> -> vector<9x256xf32>
    %c6 = arith.constant 6 : index
    %c0_74 = arith.constant 0 : index
    %c0_75 = arith.constant 0 : index
    %217 = vector.load %arg4[%c6, %c0_74, %c0_75] : memref<8x9x9xf32, #tpu.memory_space<vmem>>, vector<1x9x9xf32>
    %218 = vector.shape_cast %217 : vector<1x9x9xf32> to vector<9x9xf32>
    %cst_76 = arith.constant dense<0.000000e+00> : vector<9x256xf32>
    %219 = tpu.matmul %218, %216, %cst_76 {dimension_numbers = #tpu.dot_dimension_numbers<[1], [0], [0], [1], [0, 0, 1, 1], [], []>} : vector<9x9xf32>, vector<9x256xf32>, vector<9x256xf32> -> vector<9x256xf32>
    %220 = vector.extract_strided_slice %219 {offsets = [0, 0], sizes = [8, 256], strides = [1, 1]} : vector<9x256xf32> to vector<8x256xf32>
    %221 = arith.addf %220, %196 : vector<8x256xf32>
    %222 = vector.extract_strided_slice %219 {offsets = [8, 0], sizes = [1, 256], strides = [1, 1]} : vector<9x256xf32> to vector<1x256xf32>
    %223 = arith.addf %198, %222 : vector<1x256xf32>
    %c16_i32_77 = arith.constant 16 : i32
    %224 = tpu.dynamic_rotate %221 by %c16_i32_77 dim 1 : vector<8x256xf32>, i32 -> vector<8x256xf32>
    %225 = arith.mulf %224, %49 : vector<8x256xf32>
    %c8_i32_78 = arith.constant 8 : i32
    %226 = tpu.dynamic_rotate %221 by %c8_i32_78 dim 1 : vector<8x256xf32>, i32 -> vector<8x256xf32>
    %227 = arith.mulf %226, %47 : vector<8x256xf32>
    %228 = tpu.concatenate %225, %227, %221, %2 in 0 : vector<8x256xf32>, vector<8x256xf32>, vector<8x256xf32>, vector<1x256xf32> -> vector<25x256xf32>
    %c6_79 = arith.constant 6 : index
    %c0_80 = arith.constant 0 : index
    %c0_81 = arith.constant 0 : index
    %229 = vector.load %arg3[%c6_79, %c0_80, %c0_81] : memref<7x16x25xf32, #tpu.memory_space<vmem>>, vector<1x16x25xf32>
    %230 = vector.shape_cast %229 : vector<1x16x25xf32> to vector<16x25xf32>
    %cst_82 = arith.constant dense<0.000000e+00> : vector<16x256xf32>
    %231 = tpu.matmul %230, %228, %cst_82 {dimension_numbers = #tpu.dot_dimension_numbers<[1], [0], [0], [1], [0, 0, 1, 1], [], []>} : vector<16x25xf32>, vector<25x256xf32>, vector<16x256xf32> -> vector<16x256xf32>
    %232 = vector.extract_strided_slice %231 {offsets = [0, 0], sizes = [8, 256], strides = [1, 1]} : vector<16x256xf32> to vector<8x256xf32>
    %233 = math.tanh %232 : vector<8x256xf32>
    %234 = vector.extract_strided_slice %231 {offsets = [8, 0], sizes = [8, 256], strides = [1, 1]} : vector<16x256xf32> to vector<8x256xf32>
    %235 = arith.negf %234 : vector<8x256xf32>
    %236 = math.exp %235 : vector<8x256xf32>
    %cst_83 = arith.constant 1.000000e+00 : f32
    %237 = vector.broadcast %cst_83 : f32 to vector<8x256xf32>
    %238 = arith.addf %237, %236 : vector<8x256xf32>
    %239 = arith.divf %237, %238 : vector<8x256xf32>
    %240 = arith.mulf %233, %239 : vector<8x256xf32>
    %241 = tpu.concatenate %240, %2 in 0 : vector<8x256xf32>, vector<1x256xf32> -> vector<9x256xf32>
    %c7 = arith.constant 7 : index
    %c0_84 = arith.constant 0 : index
    %c0_85 = arith.constant 0 : index
    %242 = vector.load %arg4[%c7, %c0_84, %c0_85] : memref<8x9x9xf32, #tpu.memory_space<vmem>>, vector<1x9x9xf32>
    %243 = vector.shape_cast %242 : vector<1x9x9xf32> to vector<9x9xf32>
    %cst_86 = arith.constant dense<0.000000e+00> : vector<9x256xf32>
    %244 = tpu.matmul %243, %241, %cst_86 {dimension_numbers = #tpu.dot_dimension_numbers<[1], [0], [0], [1], [0, 0, 1, 1], [], []>} : vector<9x9xf32>, vector<9x256xf32>, vector<9x256xf32> -> vector<9x256xf32>
    %245 = vector.extract_strided_slice %244 {offsets = [8, 0], sizes = [1, 256], strides = [1, 1]} : vector<9x256xf32> to vector<1x256xf32>
    %246 = arith.addf %223, %245 : vector<1x256xf32>
    %c0_87 = arith.constant 0 : index
    %c0_88 = arith.constant 0 : index
    %c0_89 = arith.constant 0 : index
    %247 = vector.load %arg5[%c0_87, %c0_88, %c0_89] : memref<1x1x256xf32, #tpu.memory_space<vmem>>, vector<1x1x256xf32>
    %248 = vector.shape_cast %247 : vector<1x1x256xf32> to vector<1x256xf32>
    %249 = vector.shape_cast %246 : vector<1x256xf32> to vector<1x1x256xf32>
    tpu.vector_store %arg5[%c0_87, %c0_88, %c0_89], %249 {strides = array<i32>} : memref<1x1x256xf32, #tpu.memory_space<vmem>>, vector<1x1x256xf32>,
    return
  }
  func.func @transform_0(%arg0: i32) -> (i32, i32, i32) {
    %c0_i32 = arith.constant 0 : i32
    %c0_i32_0 = arith.constant 0 : i32
    %c0_i32_1 = arith.constant 0 : i32
    return %arg0, %c0_i32, %c0_i32_0 : i32, i32, i32
  }
  func.func @transform_1(%arg0: i32) -> (i32, i32) {
    %c0_i32 = arith.constant 0 : i32
    %c0_i32_0 = arith.constant 0 : i32
    %c0_i32_1 = arith.constant 0 : i32
    return %c0_i32, %c0_i32_0 : i32, i32
  }
  func.func @transform_2(%arg0: i32) -> (i32, i32, i32) {
    %c0_i32 = arith.constant 0 : i32
    %c0_i32_0 = arith.constant 0 : i32
    %c0_i32_1 = arith.constant 0 : i32
    %c0_i32_2 = arith.constant 0 : i32
    return %c0_i32, %c0_i32_0, %c0_i32_1 : i32, i32, i32
  }
  func.func @transform_3(%arg0: i32) -> (i32, i32, i32) {
    %c0_i32 = arith.constant 0 : i32
    %c0_i32_0 = arith.constant 0 : i32
    %c0_i32_1 = arith.constant 0 : i32
    %c0_i32_2 = arith.constant 0 : i32
    return %c0_i32, %c0_i32_0, %c0_i32_1 : i32, i32, i32
  }
  func.func @transform_4(%arg0: i32) -> (i32, i32, i32) {
    %c0_i32 = arith.constant 0 : i32
    %c0_i32_0 = arith.constant 0 : i32
    %c0_i32_1 = arith.constant 0 : i32
    return %arg0, %c0_i32, %c0_i32_0 : i32, i32, i32
  }
}

</mosaic_0001>

<llo_original>
// kernel: tpu_custom_call.1
$region0: #{tpu_custom_call.1}
  #allocation0 [shape = 'u32[]', space=smem, size = 0x4, offset = 0x4, fixed_abs, tag = 'smem constant byte address 0x4 - core index']
  #allocation1 [shape = 'u32[72,128]{1,0:T(1,128)}', space=vmem, size = 0x9000, scoped, tag = 'internal scratch']
  %s0 = inlined_call_operand.vmem [shape: f32[1,1,256], index: 0, kind: input, shape index: {}]
  %s1 = inlined_call_operand.vmem [shape: f32[16,4], index: 1, kind: input, shape index: {}]
  %s2 = inlined_call_operand.vmem [shape: f32[7,16,25], index: 2, kind: input, shape index: {}]
  %s3 = inlined_call_operand.vmem [shape: f32[8,9,9], index: 3, kind: input, shape index: {}]
  %s4 = inlined_call_operand.hbm [shape: f32[1,1,256], index: 4, kind: output, shape index: {}]
  %s5 = sld [smem:[#allocation0]]
  $region26: #{tpu_custom_call.1} parent=0
    _
  %s7 = ssub.s32 1, %s5
  %s8 = scalar_select 0, %s7, %s5
  $region1: #{tpu_custom_call.1} parent=0
    #allocation2 [shape = 'u8[1024]{0}', space=vmem, size = 0x400, scoped, tag = 'output window, operand 0, single buffered']
    #allocation3 [shape = 's32[1]{0}', space=sflag, size = 0x4, scoped, tag = 'scoped memory for tpu_custom_call.1']
    %9 = vsyncpa [#allocation3], 0
    // Predicated region
    $region2: #{tpu_custom_call.1} parent=1 // pred_check
      _
    $region3: #{tpu_custom_call.1} parent=1 // pred_check_branch
      %11 = sbr.rel (0) target = $region5
    $region4: #{tpu_custom_call.1} parent=1 // pred_region
      _
    $region5: #{tpu_custom_call.1} parent=1 // pred_fallthru
      _
    // Predicated region
    $region6: #{tpu_custom_call.1} parent=1 // pred_check
      _
    $region7: #{tpu_custom_call.1} parent=1 // pred_check_branch
      %13 = sbr.rel (0) target = $region9
    $region8: #{tpu_custom_call.1} parent=1 // pred_region
      _
    $region9: #{tpu_custom_call.1} parent=1 // pred_fallthru
      _
    // Predicated region
    $region10: #{tpu_custom_call.1} parent=1 // pred_check
      _
    $region11: #{tpu_custom_call.1} parent=1 // pred_check_branch
      %15 = sbr.rel (0) target = $region13
    $region12: #{tpu_custom_call.1} parent=1 // pred_region
      _
    $region13: #{tpu_custom_call.1} parent=1 // pred_fallthru
      _
    // Predicated region
    $region14: #{tpu_custom_call.1} parent=1 // pred_check
      _
    $region15: #{tpu_custom_call.1} parent=1 // pred_check_branch
      %17 = sbr.rel (0) target = $region17
    $region16: #{tpu_custom_call.1} parent=1 // pred_region
      _
    $region17: #{tpu_custom_call.1} parent=1 // pred_fallthru
      _
    %v18 = vld [vmem:[%s0] sm:$0x3]
    %v19 = vlaneseq
    %v20 = vand.u32 %v19, 127
    %v21 = vadd.s32 %v20, 128
    %vm22 = vcmp.lt.s32.totalorder %v20, 0
    %v23 = vsub.s32 0, %v20
    %v24 = vsel %vm22, %v23, %v20
    %v25 = vshrl.u32 %v24, 7
    %v26 = vand.u32 %v24, 127
    %v27 = vsub.s32 0, %v26
    %v28 = vsel %vm22, %v27, %v26
    %vm29 = vcmp.lt.s32.totalorder %v21, 0
    %v30 = vsub.s32 0, %v21
    %v31 = vsel %vm29, %v30, %v21
    %v32 = vshrl.u32 %v31, 7
    %v33 = vand.u32 %v31, 127
    %v34 = vsub.s32 0, %v33
    %v35 = vsel %vm29, %v34, %v33
    %vm36 = vcmp.ne.s32.totalorder %v28, 0
    %vm37 = vcmp.ne.s32.totalorder %v35, 0
    %vm38 = vcmp.lt.s32.totalorder %v28, 0
    %vm39 = vcmp.lt.s32.totalorder %v35, 0
    %vm40 = vmand %vm38, %vm36
    %vm41 = vmand %vm39, %vm37
    %v42 = vadd.s32 %v28, 128
    %v43 = vadd.s32 %v35, 128
    %v44 = vsel %vm40, %v42, %v28
    %v45 = vsel %vm41, %v43, %v35
    %vm46 = vcmp.ge.s32.totalorder %v44, 1
    %vm47 = vcmp.ge.s32.totalorder %v45, 1
    %v48 = vsel %vm46, 1, 0
    %v49 = vsel %vm47, 1, 0
    %v50 = vcvt.s32.f32 %v48
    %v51 = vcvt.s32.f32 %v49
    %vm52 = vcmp.ge.s32.totalorder %v44, 2
    %vm53 = vcmp.ge.s32.totalorder %v45, 2
    %v54 = vsel %vm52, 1, 0
    %v55 = vsel %vm53, 1, 0
    %v56 = vcvt.s32.f32 %v54
    %v57 = vcvt.s32.f32 %v55
    %vm58 = vcmp.ge.s32.totalorder %v44, 4
    %vm59 = vcmp.ge.s32.totalorder %v45, 4
    %v60 = vsel %vm58, 1, 0
    %v61 = vsel %vm59, 1, 0
    %v62 = vcvt.s32.f32 %v60
    %v63 = vcvt.s32.f32 %v61
    %vm64 = vcmp.ge.s32.totalorder %v44, 8
    %vm65 = vcmp.ge.s32.totalorder %v45, 8
    %v66 = vsel %vm64, 1, 0
    %v67 = vsel %vm65, 1, 0
    %v68 = vcvt.s32.f32 %v66
    %v69 = vcvt.s32.f32 %v67
    %vm70 = vcmp.ge.s32.totalorder %v44, 16
    %vm71 = vcmp.ge.s32.totalorder %v45, 16
    %v72 = vsel %vm70, 1, 0
    %v73 = vsel %vm71, 1, 0
    %v74 = vcvt.s32.f32 %v72
    %v75 = vcvt.s32.f32 %v73
    %v77 = vperm.slane %v18, 0
    %v78 = vperm.slane %v18, 1
    %81 = vrot.lane.b32.xlu0 %v77, 2
    %v82 = vpop.permute.xlu0 %81
    %83 = vrot.lane.b32.xlu0 %v78, 2
    %v84 = vpop.permute.xlu0 %83
    %vm85 = vcmp.lt.s32.totalorder %v20, 2
    %v86 = vsel %vm85, %v82, %v84
    %v87 = vsel %vm85, %v84, %v82
    %v88 = vmul.f32 %v87, %v56
    %v89 = vmul.f32 %v86, %v57
    %90 = vrot.lane.b32.xlu0 %v77, 1
    %v91 = vpop.permute.xlu0 %90
    %92 = vrot.lane.b32.xlu0 %v78, 1
    %v93 = vpop.permute.xlu0 %92
    %vm94 = vcmp.lt.s32.totalorder %v20, 1
    %v95 = vsel %vm94, %v91, %v93
    %v96 = vsel %vm94, %v93, %v91
    %v97 = vmul.f32 %v96, %v50
    %v98 = vmul.f32 %v95, %v51
    %v101 = vrot.slane %v97, 7
    %v102 = vrot.slane %v98, 7
    %vm105 = vcmask 1040384
    %v106 = vsel %vm105, %v88, %v101
    %v107 = vsel %vm105, %v89, %v102
    %vm108 = vcmask 1041408
    %v109 = vsel %vm108, %v106, %v77
    %v110 = vsel %vm108, %v107, %v78
    %vm111 = vcmask 1042432
    %v112 = vsel %vm111, %v109, 1.0
    %v113 = vsel %vm111, %v110, 1.0
    %v114 = vld [vmem:[%s1] sm:$0xff]
    %v115 = vld [vmem:[%s1 + $0x8] sm:$0xff]
    %vm116 = vcmask 31744
    %v118 = vsel %vm116, %v114, 0
    %v121 = vsel %vm116, %v115, 0
    %vm123 = vcmask 1043456
    %v125 = vsel %vm123, %v112, 0
    %v128 = vsel %vm123, %v113, 0
    %130 = vmatpush.msra.mxu0 0.0
    %131 = vmatpush.msra.mxu0 0.0
    %132 = vmatpush.msra.mxu0 0.0
    %133 = vmatpush.msra.mxu0 0.0
    %134 = vmatpush.msra.mxu0 0.0
    %135 = vmatpush.msra.mxu0 0.0
    %136 = vmatpush.msra.mxu0 0.0
    %137 = vmatpush.msra.mxu0 0.0
    %138 = vmatpush.msra.mxu0 0.0
    %139 = vmatpush.msra.mxu0 0.0
    %140 = vmatpush.msra.mxu0 0.0
    %141 = vmatpush.msra.mxu0 0.0
    %142 = vmatpush.msra.mxu0 0.0
    %143 = vmatpush.msra.mxu0 0.0
    %144 = vmatpush.msra.mxu0 0.0
    %145 = vmatpush.msra.mxu0 %v125
    %146 = vmatmul.f32.gmra.mxu0 %v118
    %v147 = vpop.f32.mrf.mxu0
    %v148 = vadd.f32 0.0, %v147
    %149 = vmatmul.f32.gmra.mxu0 %v121
    %v150 = vpop.f32.mrf.mxu0
    %v151 = vadd.f32 0.0, %v150
    %152 = vdwg.mxu0
    %153 = vmatpush.msra.mxu0 0.0
    %154 = vmatpush.msra.mxu0 0.0
    %155 = vmatpush.msra.mxu0 0.0
    %156 = vmatpush.msra.mxu0 0.0
    %157 = vmatpush.msra.mxu0 0.0
    %158 = vmatpush.msra.mxu0 0.0
    %159 = vmatpush.msra.mxu0 0.0
    %160 = vmatpush.msra.mxu0 0.0
    %161 = vmatpush.msra.mxu0 0.0
    %162 = vmatpush.msra.mxu0 0.0
    %163 = vmatpush.msra.mxu0 0.0
    %164 = vmatpush.msra.mxu0 0.0
    %165 = vmatpush.msra.mxu0 0.0
    %166 = vmatpush.msra.mxu0 0.0
    %167 = vmatpush.msra.mxu0 0.0
    %168 = vmatpush.msra.mxu0 %v128
    %169 = vmatmul.f32.gmra.mxu0 %v118
    %v170 = vpop.f32.mrf.mxu0
    %v171 = vadd.f32 0.0, %v170
    %172 = vmatmul.f32.gmra.mxu0 %v121
    %v173 = vpop.f32.mrf.mxu0
    %v174 = vadd.f32 0.0, %v173
    %175 = vdwg.mxu0
    %v176 = vtanh.pop %v148
    %v177 = vtanh.pop %v171
    %v178 = vxor.u32 %v151, 2147483648
    %v179 = vxor.u32 %v174, 2147483648
    %v180 = vmul.f32 %v178, 1.442695
    %v181 = vpow.pop %v180
    %v182 = vmul.f32 %v179, 1.442695
    %v183 = vpow.pop %v182
    %v184 = vadd.f32 %v181, 1.0
    %v185 = vadd.f32 %v183, 1.0
    %v186 = vrcp.pop %v184
    %v187 = vmul.f32 %v184, %v186
    %v188 = vsub.f32 1.0, %v187
    %v189 = vmul.f32 %v186, %v188
    %v190 = vadd.f32 %v186, %v189
    %vm191 = vweird.f32 %v184
    %vm192 = vweird.f32 %v186
    %vm193 = vmor %vm191, %vm192
    %v194 = vsel %vm193, %v186, %v190
    %v195 = vand.u32 2147483647, %v184
    %vm196 = vcmp.eq.f32.partialorder %v195, 8.507059e+37
    %v197 = vand.u32 %v184, 2147483648
    %v198 = vor.u32 1.1754944e-38, %v197
    %v199 = vsel %vm196, %v198, %v194
    %v200 = vmul.f32 1.0, %v199
    %v201 = vrcp.pop %v185
    %v202 = vmul.f32 %v185, %v201
    %v203 = vsub.f32 1.0, %v202
    %v204 = vmul.f32 %v201, %v203
    %v205 = vadd.f32 %v201, %v204
    %vm206 = vweird.f32 %v185
    %vm207 = vweird.f32 %v201
    %vm208 = vmor %vm206, %vm207
    %v209 = vsel %vm208, %v201, %v205
    %v210 = vand.u32 2147483647, %v185
    %vm211 = vcmp.eq.f32.partialorder %v210, 8.507059e+37
    %v212 = vand.u32 %v185, 2147483648
    %v213 = vor.u32 1.1754944e-38, %v212
    %v214 = vsel %vm211, %v213, %v209
    %v215 = vmul.f32 1.0, %v214
    %v216 = vmul.f32 %v176, %v200
    %v217 = vmul.f32 %v177, %v215
    %v218 = vld [vmem:[%s3] sm:$0xff]
    %v219 = vld [vmem:[%s3 + $0x8] sm:$0x1]
    %vm220 = vcmask 72704
    %v222 = vsel %vm220, %v218, 0
    %v225 = vsel %vm220, %v219, 0
    %v228 = vsel %vm105, 1.0, 0
    %230 = vmatpush.msra.mxu0 0.0
    %231 = vmatpush.msra.mxu0 0.0
    %232 = vmatpush.msra.mxu0 0.0
    %233 = vmatpush.msra.mxu0 0.0
    %234 = vmatpush.msra.mxu0 0.0
    %235 = vmatpush.msra.mxu0 0.0
    %236 = vmatpush.msra.mxu0 0.0
    %237 = vmatpush.msra.mxu0 0.0
    %238 = vmatpush.msra.mxu0 0.0
    %239 = vmatpush.msra.mxu0 0.0
    %240 = vmatpush.msra.mxu0 0.0
    %241 = vmatpush.msra.mxu0 0.0
    %242 = vmatpush.msra.mxu0 0.0
    %243 = vmatpush.msra.mxu0 0.0
    %244 = vmatpush.msra.mxu0 %v228
    %245 = vmatpush.msra.mxu0 %v216
    %246 = vmatmul.f32.gmra.mxu0 %v222
    %v247 = vpop.f32.mrf.mxu0
    %v248 = vadd.f32 0.0, %v247
    %249 = vmatmul.f32.gmra.mxu0 %v225
    %v250 = vpop.f32.mrf.mxu0
    %v251 = vadd.f32 0.0, %v250
    %252 = vdwg.mxu0
    %253 = vmatpush.msra.mxu0 0.0
    %254 = vmatpush.msra.mxu0 0.0
    %255 = vmatpush.msra.mxu0 0.0
    %256 = vmatpush.msra.mxu0 0.0
    %257 = vmatpush.msra.mxu0 0.0
    %258 = vmatpush.msra.mxu0 0.0
    %259 = vmatpush.msra.mxu0 0.0
    %260 = vmatpush.msra.mxu0 0.0
    %261 = vmatpush.msra.mxu0 0.0
    %262 = vmatpush.msra.mxu0 0.0
    %263 = vmatpush.msra.mxu0 0.0
    %264 = vmatpush.msra.mxu0 0.0
    %265 = vmatpush.msra.mxu0 0.0
    %266 = vmatpush.msra.mxu0 0.0
    %267 = vmatpush.msra.mxu0 %v228
    %268 = vmatpush.msra.mxu0 %v217
    %269 = vmatmul.f32.gmra.mxu0 %v222
    %v270 = vpop.f32.mrf.mxu0
    %v271 = vadd.f32 0.0, %v270
    %272 = vmatmul.f32.gmra.mxu0 %v225
    %v273 = vpop.f32.mrf.mxu0
    %v274 = vadd.f32 0.0, %v273
    %275 = vdwg.mxu0
    %v276 = vadd.f32 %v251, 0.0
    %v277 = vadd.f32 %v274, 0.0
    %278 = vrot.lane.b32.xlu0 %v248, 4
    %v279 = vpop.permute.xlu0 %278
    %280 = vrot.lane.b32.xlu0 %v271, 4
    %v281 = vpop.permute.xlu0 %280
    %vm282 = vcmp.lt.s32.totalorder %v20, 4
    %v283 = vsel %vm282, %v279, %v281
    %v284 = vsel %vm282, %v281, %v279
    %v285 = vmul.f32 %v284, %v62
    %v286 = vmul.f32 %v283, %v63
    %287 = vrot.lane.b32.xlu0 %v248, 2
    %v288 = vpop.permute.xlu0 %287
    %289 = vrot.lane.b32.xlu0 %v271, 2
    %v290 = vpop.permute.xlu0 %289
    %v291 = vsel %vm85, %v288, %v290
    %v292 = vsel %vm85, %v290, %v288
    %v293 = vmul.f32 %v292, %v56
    %v294 = vmul.f32 %v291, %v57
    %v295 = vld [vmem:[%s2] sm:$0xff]
    %v296 = vld [vmem:[%s2 + $0x8] sm:$0xff]
    %vm297 = vcmask 203776
    %v299 = vsel %vm297, %v295, 0
    %v302 = vsel %vm297, %v296, 0
    %304 = vmatpush.msra.mxu0 0.0
    %305 = vmatpush.msra.mxu0 0.0
    %306 = vmatpush.msra.mxu0 0.0
    %307 = vmatpush.msra.mxu0 0.0
    %308 = vmatpush.msra.mxu0 0.0
    %309 = vmatpush.msra.mxu0 0.0
    %310 = vmatpush.msra.mxu0 0.0
    %311 = vmatpush.msra.mxu0 0.0
    %312 = vmatpush.msra.mxu0 0.0
    %313 = vmatpush.msra.mxu0 0.0
    %314 = vmatpush.msra.mxu0 0.0
    %315 = vmatpush.msra.mxu0 0.0
    %316 = vmatpush.msra.mxu0 %v228
    %317 = vmatpush.msra.mxu0 %v248
    %318 = vmatpush.msra.mxu0 %v293
    %319 = vmatpush.msra.mxu0 %v285
    %320 = vmatmul.f32.gmra.mxu0 %v299
    %v321 = vpop.f32.mrf.mxu0
    %v322 = vadd.f32 0.0, %v321
    %323 = vmatmul.f32.gmra.mxu0 %v302
    %v324 = vpop.f32.mrf.mxu0
    %v325 = vadd.f32 0.0, %v324
    %326 = vdwg.mxu0
    %327 = vmatpush.msra.mxu0 0.0
    %328 = vmatpush.msra.mxu0 0.0
    %329 = vmatpush.msra.mxu0 0.0
    %330 = vmatpush.msra.mxu0 0.0
    %331 = vmatpush.msra.mxu0 0.0
    %332 = vmatpush.msra.mxu0 0.0
    %333 = vmatpush.msra.mxu0 0.0
    %334 = vmatpush.msra.mxu0 0.0
    %335 = vmatpush.msra.mxu0 0.0
    %336 = vmatpush.msra.mxu0 0.0
    %337 = vmatpush.msra.mxu0 0.0
    %338 = vmatpush.msra.mxu0 0.0
    %339 = vmatpush.msra.mxu0 %v228
    %340 = vmatpush.msra.mxu0 %v271
    %341 = vmatpush.msra.mxu0 %v294
    %342 = vmatpush.msra.mxu0 %v286
    %343 = vmatmul.f32.gmra.mxu0 %v299
    %v344 = vpop.f32.mrf.mxu0
    %v345 = vadd.f32 0.0, %v344
    %346 = vmatmul.f32.gmra.mxu0 %v302
    %v347 = vpop.f32.mrf.mxu0
    %v348 = vadd.f32 0.0, %v347
    %349 = vdwg.mxu0
    %v350 = vtanh.pop %v322
    %v351 = vtanh.pop %v345
    %v352 = vxor.u32 %v325, 2147483648
    %v353 = vxor.u32 %v348, 2147483648
    %v354 = vmul.f32 %v352, 1.442695
    %v355 = vpow.pop %v354
    %v356 = vmul.f32 %v353, 1.442695
    %v357 = vpow.pop %v356
    %v358 = vadd.f32 %v355, 1.0
    %v359 = vadd.f32 %v357, 1.0
    %v360 = vrcp.pop %v358
    %v361 = vmul.f32 %v358, %v360
    %v362 = vsub.f32 1.0, %v361
    %v363 = vmul.f32 %v360, %v362
    %v364 = vadd.f32 %v360, %v363
    %vm365 = vweird.f32 %v358
    %vm366 = vweird.f32 %v360
    %vm367 = vmor %vm365, %vm366
    %v368 = vsel %vm367, %v360, %v364
    %v369 = vand.u32 2147483647, %v358
    %vm370 = vcmp.eq.f32.partialorder %v369, 8.507059e+37
    %v371 = vand.u32 %v358, 2147483648
    %v372 = vor.u32 1.1754944e-38, %v371
    %v373 = vsel %vm370, %v372, %v368
    %v374 = vmul.f32 1.0, %v373
    %v375 = vrcp.pop %v359
    %v376 = vmul.f32 %v359, %v375
    %v377 = vsub.f32 1.0, %v376
    %v378 = vmul.f32 %v375, %v377
    %v379 = vadd.f32 %v375, %v378
    %vm380 = vweird.f32 %v359
    %vm381 = vweird.f32 %v375
    %vm382 = vmor %vm380, %vm381
    %v383 = vsel %vm382, %v375, %v379
    %v384 = vand.u32 2147483647, %v359
    %vm385 = vcmp.eq.f32.partialorder %v384, 8.507059e+37
    %v386 = vand.u32 %v359, 2147483648
    %v387 = vor.u32 1.1754944e-38, %v386
    %v388 = vsel %vm385, %v387, %v383
    %v389 = vmul.f32 1.0, %v388
    %v390 = vmul.f32 %v350, %v374
    %v391 = vmul.f32 %v351, %v389
    %s392 = scalar_lea.vmem %s3, 16
    %v393 = vld [vmem:[%s392] sm:$0xff]
    %v394 = vld [vmem:[%s392 + $0x8] sm:$0x1]
    %v396 = vsel %vm220, %v393, 0
    %v399 = vsel %vm220, %v394, 0
    %401 = vmatpush.msra.mxu0 0.0
    %402 = vmatpush.msra.mxu0 0.0
    %403 = vmatpush.msra.mxu0 0.0
    %404 = vmatpush.msra.mxu0 0.0
    %405 = vmatpush.msra.mxu0 0.0
    %406 = vmatpush.msra.mxu0 0.0
    %407 = vmatpush.msra.mxu0 0.0
    %408 = vmatpush.msra.mxu0 0.0
    %409 = vmatpush.msra.mxu0 0.0
    %410 = vmatpush.msra.mxu0 0.0
    %411 = vmatpush.msra.mxu0 0.0
    %412 = vmatpush.msra.mxu0 0.0
    %413 = vmatpush.msra.mxu0 0.0
    %414 = vmatpush.msra.mxu0 0.0
    %415 = vmatpush.msra.mxu0 %v228
    %416 = vmatpush.msra.mxu0 %v390
    %417 = vmatmul.f32.gmra.mxu0 %v396
    %v418 = vpop.f32.mrf.mxu0
    %v419 = vadd.f32 0.0, %v418
    %420 = vmatmul.f32.gmra.mxu0 %v399
    %v421 = vpop.f32.mrf.mxu0
    %v422 = vadd.f32 0.0, %v421
    %423 = vdwg.mxu0
    %424 = vmatpush.msra.mxu0 0.0
    %425 = vmatpush.msra.mxu0 0.0
    %426 = vmatpush.msra.mxu0 0.0
    %427 = vmatpush.msra.mxu0 0.0
    %428 = vmatpush.msra.mxu0 0.0
    %429 = vmatpush.msra.mxu0 0.0
    %430 = vmatpush.msra.mxu0 0.0
    %431 = vmatpush.msra.mxu0 0.0
    %432 = vmatpush.msra.mxu0 0.0
    %433 = vmatpush.msra.mxu0 0.0
    %434 = vmatpush.msra.mxu0 0.0
    %435 = vmatpush.msra.mxu0 0.0
    %436 = vmatpush.msra.mxu0 0.0
    %437 = vmatpush.msra.mxu0 0.0
    %438 = vmatpush.msra.mxu0 %v228
    %439 = vmatpush.msra.mxu0 %v391
    %440 = vmatmul.f32.gmra.mxu0 %v396
    %v441 = vpop.f32.mrf.mxu0
    %v442 = vadd.f32 0.0, %v441
    %443 = vmatmul.f32.gmra.mxu0 %v399
    %v444 = vpop.f32.mrf.mxu0
    %v445 = vadd.f32 0.0, %v444
    %446 = vdwg.mxu0
    %v447 = vadd.f32 %v419, %v248
    %v448 = vadd.f32 %v442, %v271
    %v449 = vadd.f32 %v276, %v422
    %v450 = vadd.f32 %v277, %v445
    %451 = vrot.lane.b32.xlu0 %v447, 8
    %v452 = vpop.permute.xlu0 %451
    %453 = vrot.lane.b32.xlu0 %v448, 8
    %v454 = vpop.permute.xlu0 %453
    %vm455 = vcmp.lt.s32.totalorder %v20, 8
    %v456 = vsel %vm455, %v452, %v454
    %v457 = vsel %vm455, %v454, %v452
    %v458 = vmul.f32 %v457, %v68
    %v459 = vmul.f32 %v456, %v69
    %460 = vrot.lane.b32.xlu0 %v447, 4
    %v461 = vpop.permute.xlu0 %460
    %462 = vrot.lane.b32.xlu0 %v448, 4
    %v463 = vpop.permute.xlu0 %462
    %v464 = vsel %vm282, %v461, %v463
    %v465 = vsel %vm282, %v463, %v461
    %v466 = vmul.f32 %v465, %v62
    %v467 = vmul.f32 %v464, %v63
    %s468 = scalar_lea.vmem %s2, 16
    %v469 = vld [vmem:[%s468] sm:$0xff]
    %v470 = vld [vmem:[%s468 + $0x8] sm:$0xff]
    %v472 = vsel %vm297, %v469, 0
    %v475 = vsel %vm297, %v470, 0
    %477 = vmatpush.msra.mxu0 0.0
    %478 = vmatpush.msra.mxu0 0.0
    %479 = vmatpush.msra.mxu0 0.0
    %480 = vmatpush.msra.mxu0 0.0
    %481 = vmatpush.msra.mxu0 0.0
    %482 = vmatpush.msra.mxu0 0.0
    %483 = vmatpush.msra.mxu0 0.0
    %484 = vmatpush.msra.mxu0 0.0
    %485 = vmatpush.msra.mxu0 0.0
    %486 = vmatpush.msra.mxu0 0.0
    %487 = vmatpush.msra.mxu0 0.0
    %488 = vmatpush.msra.mxu0 0.0
    %489 = vmatpush.msra.mxu0 %v228
    %490 = vmatpush.msra.mxu0 %v447
    %491 = vmatpush.msra.mxu0 %v466
    %492 = vmatpush.msra.mxu0 %v458
    %493 = vmatmul.f32.gmra.mxu0 %v472
    %v494 = vpop.f32.mrf.mxu0
    %v495 = vadd.f32 0.0, %v494
    %496 = vmatmul.f32.gmra.mxu0 %v475
    %v497 = vpop.f32.mrf.mxu0
    %v498 = vadd.f32 0.0, %v497
    %499 = vdwg.mxu0
    %500 = vmatpush.msra.mxu0 0.0
    %501 = vmatpush.msra.mxu0 0.0
    %502 = vmatpush.msra.mxu0 0.0
    %503 = vmatpush.msra.mxu0 0.0
    %504 = vmatpush.msra.mxu0 0.0
    %505 = vmatpush.msra.mxu0 0.0
    %506 = vmatpush.msra.mxu0 0.0
    %507 = vmatpush.msra.mxu0 0.0
    %508 = vmatpush.msra.mxu0 0.0
    %509 = vmatpush.msra.mxu0 0.0
    %510 = vmatpush.msra.mxu0 0.0
    %511 = vmatpush.msra.mxu0 0.0
    %512 = vmatpush.msra.mxu0 %v228
    %513 = vmatpush.msra.mxu0 %v448
    %514 = vmatpush.msra.mxu0 %v467
    %515 = vmatpush.msra.mxu0 %v459
    %516 = vmatmul.f32.gmra.mxu0 %v472
    %v517 = vpop.f32.mrf.mxu0
    %v518 = vadd.f32 0.0, %v517
    %519 = vmatmul.f32.gmra.mxu0 %v475
    %v520 = vpop.f32.mrf.mxu0
    %v521 = vadd.f32 0.0, %v520
    %522 = vdwg.mxu0
    %v523 = vtanh.pop %v495
    %v524 = vtanh.pop %v518
    %v525 = vxor.u32 %v498, 2147483648
    %v526 = vxor.u32 %v521, 2147483648
    %v527 = vmul.f32 %v525, 1.442695
    %v528 = vpow.pop %v527
    %v529 = vmul.f32 %v526, 1.442695
    %v530 = vpow.pop %v529
    %v531 = vadd.f32 %v528, 1.0
    %v532 = vadd.f32 %v530, 1.0
    %v533 = vrcp.pop %v531
    %v534 = vmul.f32 %v531, %v533
    %v535 = vsub.f32 1.0, %v534
    %v536 = vmul.f32 %v533, %v535
    %v537 = vadd.f32 %v533, %v536
    %vm538 = vweird.f32 %v531
    %vm539 = vweird.f32 %v533
    %vm540 = vmor %vm538, %vm539
    %v541 = vsel %vm540, %v533, %v537
    %v542 = vand.u32 2147483647, %v531
    %vm543 = vcmp.eq.f32.partialorder %v542, 8.507059e+37
    %v544 = vand.u32 %v531, 2147483648
    %v545 = vor.u32 1.1754944e-38, %v544
    %v546 = vsel %vm543, %v545, %v541
    %v547 = vmul.f32 1.0, %v546
    %v548 = vrcp.pop %v532
    %v549 = vmul.f32 %v532, %v548
    %v550 = vsub.f32 1.0, %v549
    %v551 = vmul.f32 %v548, %v550
    %v552 = vadd.f32 %v548, %v551
    %vm553 = vweird.f32 %v532
    %vm554 = vweird.f32 %v548
    %vm555 = vmor %vm553, %vm554
    %v556 = vsel %vm555, %v548, %v552
    %v557 = vand.u32 2147483647, %v532
    %vm558 = vcmp.eq.f32.partialorder %v557, 8.507059e+37
    %v559 = vand.u32 %v532, 2147483648
    %v560 = vor.u32 1.1754944e-38, %v559
    %v561 = vsel %vm558, %v560, %v556
    %v562 = vmul.f32 1.0, %v561
    %v563 = vmul.f32 %v523, %v547
    %v564 = vmul.f32 %v524, %v562
    %s565 = scalar_lea.vmem %s3, 32
    %v566 = vld [vmem:[%s565] sm:$0xff]
    %v567 = vld [vmem:[%s565 + $0x8] sm:$0x1]
    %v569 = vsel %vm220, %v566, 0
    %v572 = vsel %vm220, %v567, 0
    %574 = vmatpush.msra.mxu0 0.0
    %575 = vmatpush.msra.mxu0 0.0
    %576 = vmatpush.msra.mxu0 0.0
    %577 = vmatpush.msra.mxu0 0.0
    %578 = vmatpush.msra.mxu0 0.0
    %579 = vmatpush.msra.mxu0 0.0
    %580 = vmatpush.msra.mxu0 0.0
    %581 = vmatpush.msra.mxu0 0.0
    %582 = vmatpush.msra.mxu0 0.0
    %583 = vmatpush.msra.mxu0 0.0
    %584 = vmatpush.msra.mxu0 0.0
    %585 = vmatpush.msra.mxu0 0.0
    %586 = vmatpush.msra.mxu0 0.0
    %587 = vmatpush.msra.mxu0 0.0
    %588 = vmatpush.msra.mxu0 %v228
    %589 = vmatpush.msra.mxu0 %v563
    %590 = vmatmul.f32.gmra.mxu0 %v569
    %v591 = vpop.f32.mrf.mxu0
    %v592 = vadd.f32 0.0, %v591
    %593 = vmatmul.f32.gmra.mxu0 %v572
    %v594 = vpop.f32.mrf.mxu0
    %v595 = vadd.f32 0.0, %v594
    %596 = vdwg.mxu0
    %597 = vmatpush.msra.mxu0 0.0
    %598 = vmatpush.msra.mxu0 0.0
    %599 = vmatpush.msra.mxu0 0.0
    %600 = vmatpush.msra.mxu0 0.0
    %601 = vmatpush.msra.mxu0 0.0
    %602 = vmatpush.msra.mxu0 0.0
    %603 = vmatpush.msra.mxu0 0.0
    %604 = vmatpush.msra.mxu0 0.0
    %605 = vmatpush.msra.mxu0 0.0
    %606 = vmatpush.msra.mxu0 0.0
    %607 = vmatpush.msra.mxu0 0.0
    %608 = vmatpush.msra.mxu0 0.0
    %609 = vmatpush.msra.mxu0 0.0
    %610 = vmatpush.msra.mxu0 0.0
    %611 = vmatpush.msra.mxu0 %v228
    %612 = vmatpush.msra.mxu0 %v564
    %613 = vmatmul.f32.gmra.mxu0 %v569
    %v614 = vpop.f32.mrf.mxu0
    %v615 = vadd.f32 0.0, %v614
    %616 = vmatmul.f32.gmra.mxu0 %v572
    %v617 = vpop.f32.mrf.mxu0
    %v618 = vadd.f32 0.0, %v617
    %619 = vdwg.mxu0
    %v620 = vadd.f32 %v592, %v447
    %v621 = vadd.f32 %v615, %v448
    %v622 = vadd.f32 %v449, %v595
    %v623 = vadd.f32 %v450, %v618
    %624 = vrot.lane.b32.xlu0 %v620, 16
    %v625 = vpop.permute.xlu0 %624
    %626 = vrot.lane.b32.xlu0 %v621, 16
    %v627 = vpop.permute.xlu0 %626
    %vm628 = vcmp.lt.s32.totalorder %v20, 16
    %v629 = vsel %vm628, %v625, %v627
    %v630 = vsel %vm628, %v627, %v625
    %v631 = vmul.f32 %v630, %v74
    %v632 = vmul.f32 %v629, %v75
    %633 = vrot.lane.b32.xlu0 %v620, 8
    %v634 = vpop.permute.xlu0 %633
    %635 = vrot.lane.b32.xlu0 %v621, 8
    %v636 = vpop.permute.xlu0 %635
    %v637 = vsel %vm455, %v634, %v636
    %v638 = vsel %vm455, %v636, %v634
    %v639 = vmul.f32 %v638, %v68
    %v640 = vmul.f32 %v637, %v69
    %s641 = scalar_lea.vmem %s2, 32
    %v642 = vld [vmem:[%s641] sm:$0xff]
    %v643 = vld [vmem:[%s641 + $0x8] sm:$0xff]
    %v645 = vsel %vm297, %v642, 0
    %v648 = vsel %vm297, %v643, 0
    %650 = vmatpush.msra.mxu0 0.0
    %651 = vmatpush.msra.mxu0 0.0
    %652 = vmatpush.msra.mxu0 0.0
    %653 = vmatpush.msra.mxu0 0.0
    %654 = vmatpush.msra.mxu0 0.0
    %655 = vmatpush.msra.mxu0 0.0
    %656 = vmatpush.msra.mxu0 0.0
    %657 = vmatpush.msra.mxu0 0.0
    %658 = vmatpush.msra.mxu0 0.0
    %659 = vmatpush.msra.mxu0 0.0
    %660 = vmatpush.msra.mxu0 0.0
    %661 = vmatpush.msra.mxu0 0.0
    %662 = vmatpush.msra.mxu0 %v228
    %663 = vmatpush.msra.mxu0 %v620
    %664 = vmatpush.msra.mxu0 %v639
    %665 = vmatpush.msra.mxu0 %v631
    %666 = vmatmul.f32.gmra.mxu0 %v645
    %v667 = vpop.f32.mrf.mxu0
    %v668 = vadd.f32 0.0, %v667
    %669 = vmatmul.f32.gmra.mxu0 %v648
    %v670 = vpop.f32.mrf.mxu0
    %v671 = vadd.f32 0.0, %v670
    %672 = vdwg.mxu0
    %673 = vmatpush.msra.mxu0 0.0
    %674 = vmatpush.msra.mxu0 0.0
    %675 = vmatpush.msra.mxu0 0.0
    %676 = vmatpush.msra.mxu0 0.0
    %677 = vmatpush.msra.mxu0 0.0
    %678 = vmatpush.msra.mxu0 0.0
    %679 = vmatpush.msra.mxu0 0.0
    %680 = vmatpush.msra.mxu0 0.0
    %681 = vmatpush.msra.mxu0 0.0
    %682 = vmatpush.msra.mxu0 0.0
    %683 = vmatpush.msra.mxu0 0.0
    %684 = vmatpush.msra.mxu0 0.0
    %685 = vmatpush.msra.mxu0 %v228
    %686 = vmatpush.msra.mxu0 %v621
    %687 = vmatpush.msra.mxu0 %v640
    %688 = vmatpush.msra.mxu0 %v632
    %689 = vmatmul.f32.gmra.mxu0 %v645
    %v690 = vpop.f32.mrf.mxu0
    %v691 = vadd.f32 0.0, %v690
    %692 = vmatmul.f32.gmra.mxu0 %v648
    %v693 = vpop.f32.mrf.mxu0
    %v694 = vadd.f32 0.0, %v693
    %695 = vdwg.mxu0
    %v696 = vtanh.pop %v668
    %v697 = vtanh.pop %v691
    %v698 = vxor.u32 %v671, 2147483648
    %v699 = vxor.u32 %v694, 2147483648
    %v700 = vmul.f32 %v698, 1.442695
    %v701 = vpow.pop %v700
    %v702 = vmul.f32 %v699, 1.442695
    %v703 = vpow.pop %v702
    %v704 = vadd.f32 %v701, 1.0
    %v705 = vadd.f32 %v703, 1.0
    %v706 = vrcp.pop %v704
    %v707 = vmul.f32 %v704, %v706
    %v708 = vsub.f32 1.0, %v707
    %v709 = vmul.f32 %v706, %v708
    %v710 = vadd.f32 %v706, %v709
    %vm711 = vweird.f32 %v704
    %vm712 = vweird.f32 %v706
    %vm713 = vmor %vm711, %vm712
    %v714 = vsel %vm713, %v706, %v710
    %v715 = vand.u32 2147483647, %v704
    %vm716 = vcmp.eq.f32.partialorder %v715, 8.507059e+37
    %v717 = vand.u32 %v704, 2147483648
    %v718 = vor.u32 1.1754944e-38, %v717
    %v719 = vsel %vm716, %v718, %v714
    %v720 = vmul.f32 1.0, %v719
    %v721 = vrcp.pop %v705
    %v722 = vmul.f32 %v705, %v721
    %v723 = vsub.f32 1.0, %v722
    %v724 = vmul.f32 %v721, %v723
    %v725 = vadd.f32 %v721, %v724
    %vm726 = vweird.f32 %v705
    %vm727 = vweird.f32 %v721
    %vm728 = vmor %vm726, %vm727
    %v729 = vsel %vm728, %v721, %v725
    %v730 = vand.u32 2147483647, %v705
    %vm731 = vcmp.eq.f32.partialorder %v730, 8.507059e+37
    %v732 = vand.u32 %v705, 2147483648
    %v733 = vor.u32 1.1754944e-38, %v732
    %v734 = vsel %vm731, %v733, %v729
    %v735 = vmul.f32 1.0, %v734
    %v736 = vmul.f32 %v696, %v720
    %v737 = vmul.f32 %v697, %v735
    %s738 = scalar_lea.vmem %s3, 48
    %v739 = vld [vmem:[%s738] sm:$0xff]
    %v740 = vld [vmem:[%s738 + $0x8] sm:$0x1]
    %v742 = vsel %vm220, %v739, 0
    %v745 = vsel %vm220, %v740, 0
    %747 = vmatpush.msra.mxu0 0.0
    %748 = vmatpush.msra.mxu0 0.0
    %749 = vmatpush.msra.mxu0 0.0
    %750 = vmatpush.msra.mxu0 0.0
    %751 = vmatpush.msra.mxu0 0.0
    %752 = vmatpush.msra.mxu0 0.0
    %753 = vmatpush.msra.mxu0 0.0
    %754 = vmatpush.msra.mxu0 0.0
    %755 = vmatpush.msra.mxu0 0.0
    %756 = vmatpush.msra.mxu0 0.0
    %757 = vmatpush.msra.mxu0 0.0
    %758 = vmatpush.msra.mxu0 0.0
    %759 = vmatpush.msra.mxu0 0.0
    %760 = vmatpush.msra.mxu0 0.0
    %761 = vmatpush.msra.mxu0 %v228
    %762 = vmatpush.msra.mxu0 %v736
    %763 = vmatmul.f32.gmra.mxu0 %v742
    %v764 = vpop.f32.mrf.mxu0
    %v765 = vadd.f32 0.0, %v764
    %766 = vmatmul.f32.gmra.mxu0 %v745
    %v767 = vpop.f32.mrf.mxu0
    %v768 = vadd.f32 0.0, %v767
    %769 = vdwg.mxu0
    %770 = vmatpush.msra.mxu0 0.0
    %771 = vmatpush.msra.mxu0 0.0
    %772 = vmatpush.msra.mxu0 0.0
    %773 = vmatpush.msra.mxu0 0.0
    %774 = vmatpush.msra.mxu0 0.0
    %775 = vmatpush.msra.mxu0 0.0
    %776 = vmatpush.msra.mxu0 0.0
    %777 = vmatpush.msra.mxu0 0.0
    %778 = vmatpush.msra.mxu0 0.0
    %779 = vmatpush.msra.mxu0 0.0
    %780 = vmatpush.msra.mxu0 0.0
    %781 = vmatpush.msra.mxu0 0.0
    %782 = vmatpush.msra.mxu0 0.0
    %783 = vmatpush.msra.mxu0 0.0
    %784 = vmatpush.msra.mxu0 %v228
    %785 = vmatpush.msra.mxu0 %v737
    %786 = vmatmul.f32.gmra.mxu0 %v742
    %v787 = vpop.f32.mrf.mxu0
    %v788 = vadd.f32 0.0, %v787
    %789 = vmatmul.f32.gmra.mxu0 %v745
    %v790 = vpop.f32.mrf.mxu0
    %v791 = vadd.f32 0.0, %v790
    %792 = vdwg.mxu0
    %v793 = vadd.f32 %v765, %v620
    %v794 = vadd.f32 %v788, %v621
    %v795 = vadd.f32 %v622, %v768
    %v796 = vadd.f32 %v623, %v791
    %797 = vrot.lane.b32.xlu0 %v793, 2
    %v798 = vpop.permute.xlu0 %797
    %799 = vrot.lane.b32.xlu0 %v794, 2
    %v800 = vpop.permute.xlu0 %799
    %v801 = vsel %vm85, %v798, %v800
    %v802 = vsel %vm85, %v800, %v798
    %v803 = vmul.f32 %v802, %v56
    %v804 = vmul.f32 %v801, %v57
    %805 = vrot.lane.b32.xlu0 %v793, 1
    %v806 = vpop.permute.xlu0 %805
    %807 = vrot.lane.b32.xlu0 %v794, 1
    %v808 = vpop.permute.xlu0 %807
    %v809 = vsel %vm94, %v806, %v808
    %v810 = vsel %vm94, %v808, %v806
    %v811 = vmul.f32 %v810, %v50
    %v812 = vmul.f32 %v809, %v51
    %s813 = scalar_lea.vmem %s2, 48
    %v814 = vld [vmem:[%s813] sm:$0xff]
    %v815 = vld [vmem:[%s813 + $0x8] sm:$0xff]
    %v817 = vsel %vm297, %v814, 0
    %v820 = vsel %vm297, %v815, 0
    %822 = vmatpush.msra.mxu0 0.0
    %823 = vmatpush.msra.mxu0 0.0
    %824 = vmatpush.msra.mxu0 0.0
    %825 = vmatpush.msra.mxu0 0.0
    %826 = vmatpush.msra.mxu0 0.0
    %827 = vmatpush.msra.mxu0 0.0
    %828 = vmatpush.msra.mxu0 0.0
    %829 = vmatpush.msra.mxu0 0.0
    %830 = vmatpush.msra.mxu0 0.0
    %831 = vmatpush.msra.mxu0 0.0
    %832 = vmatpush.msra.mxu0 0.0
    %833 = vmatpush.msra.mxu0 0.0
    %834 = vmatpush.msra.mxu0 %v228
    %835 = vmatpush.msra.mxu0 %v793
    %836 = vmatpush.msra.mxu0 %v811
    %837 = vmatpush.msra.mxu0 %v803
    %838 = vmatmul.f32.gmra.mxu0 %v817
    %v839 = vpop.f32.mrf.mxu0
    %v840 = vadd.f32 0.0, %v839
    %841 = vmatmul.f32.gmra.mxu0 %v820
    %v842 = vpop.f32.mrf.mxu0
    %v843 = vadd.f32 0.0, %v842
    %844 = vdwg.mxu0
    %845 = vmatpush.msra.mxu0 0.0
    %846 = vmatpush.msra.mxu0 0.0
    %847 = vmatpush.msra.mxu0 0.0
    %848 = vmatpush.msra.mxu0 0.0
    %849 = vmatpush.msra.mxu0 0.0
    %850 = vmatpush.msra.mxu0 0.0
    %851 = vmatpush.msra.mxu0 0.0
    %852 = vmatpush.msra.mxu0 0.0
    %853 = vmatpush.msra.mxu0 0.0
    %854 = vmatpush.msra.mxu0 0.0
    %855 = vmatpush.msra.mxu0 0.0
    %856 = vmatpush.msra.mxu0 0.0
    %857 = vmatpush.msra.mxu0 %v228
    %858 = vmatpush.msra.mxu0 %v794
    %859 = vmatpush.msra.mxu0 %v812
    %860 = vmatpush.msra.mxu0 %v804
    %861 = vmatmul.f32.gmra.mxu0 %v817
    %v862 = vpop.f32.mrf.mxu0
    %v863 = vadd.f32 0.0, %v862
    %864 = vmatmul.f32.gmra.mxu0 %v820
    %v865 = vpop.f32.mrf.mxu0
    %v866 = vadd.f32 0.0, %v865
    %867 = vdwg.mxu0
    %v868 = vtanh.pop %v840
    %v869 = vtanh.pop %v863
    %v870 = vxor.u32 %v843, 2147483648
    %v871 = vxor.u32 %v866, 2147483648
    %v872 = vmul.f32 %v870, 1.442695
    %v873 = vpow.pop %v872
    %v874 = vmul.f32 %v871, 1.442695
    %v875 = vpow.pop %v874
    %v876 = vadd.f32 %v873, 1.0
    %v877 = vadd.f32 %v875, 1.0
    %v878 = vrcp.pop %v876
    %v879 = vmul.f32 %v876, %v878
    %v880 = vsub.f32 1.0, %v879
    %v881 = vmul.f32 %v878, %v880
    %v882 = vadd.f32 %v878, %v881
    %vm883 = vweird.f32 %v876
    %vm884 = vweird.f32 %v878
    %vm885 = vmor %vm883, %vm884
    %v886 = vsel %vm885, %v878, %v882
    %v887 = vand.u32 2147483647, %v876
    %vm888 = vcmp.eq.f32.partialorder %v887, 8.507059e+37
    %v889 = vand.u32 %v876, 2147483648
    %v890 = vor.u32 1.1754944e-38, %v889
    %v891 = vsel %vm888, %v890, %v886
    %v892 = vmul.f32 1.0, %v891
    %v893 = vrcp.pop %v877
    %v894 = vmul.f32 %v877, %v893
    %v895 = vsub.f32 1.0, %v894
    %v896 = vmul.f32 %v893, %v895
    %v897 = vadd.f32 %v893, %v896
    %vm898 = vweird.f32 %v877
    %vm899 = vweird.f32 %v893
    %vm900 = vmor %vm898, %vm899
    %v901 = vsel %vm900, %v893, %v897
    %v902 = vand.u32 2147483647, %v877
    %vm903 = vcmp.eq.f32.partialorder %v902, 8.507059e+37
    %v904 = vand.u32 %v877, 2147483648
    %v905 = vor.u32 1.1754944e-38, %v904
    %v906 = vsel %vm903, %v905, %v901
    %v907 = vmul.f32 1.0, %v906
    %v908 = vmul.f32 %v868, %v892
    %v909 = vmul.f32 %v869, %v907
    %s910 = scalar_lea.vmem %s3, 64
    %v911 = vld [vmem:[%s910] sm:$0xff]
    %v912 = vld [vmem:[%s910 + $0x8] sm:$0x1]
    %v914 = vsel %vm220, %v911, 0
    %v917 = vsel %vm220, %v912, 0
    %919 = vmatpush.msra.mxu0 0.0
    %920 = vmatpush.msra.mxu0 0.0
    %921 = vmatpush.msra.mxu0 0.0
    %922 = vmatpush.msra.mxu0 0.0
    %923 = vmatpush.msra.mxu0 0.0
    %924 = vmatpush.msra.mxu0 0.0
    %925 = vmatpush.msra.mxu0 0.0
    %926 = vmatpush.msra.mxu0 0.0
    %927 = vmatpush.msra.mxu0 0.0
    %928 = vmatpush.msra.mxu0 0.0
    %929 = vmatpush.msra.mxu0 0.0
    %930 = vmatpush.msra.mxu0 0.0
    %931 = vmatpush.msra.mxu0 0.0
    %932 = vmatpush.msra.mxu0 0.0
    %933 = vmatpush.msra.mxu0 %v228
    %934 = vmatpush.msra.mxu0 %v908
    %935 = vmatmul.f32.gmra.mxu0 %v914
    %v936 = vpop.f32.mrf.mxu0
    %v937 = vadd.f32 0.0, %v936
    %938 = vmatmul.f32.gmra.mxu0 %v917
    %v939 = vpop.f32.mrf.mxu0
    %v940 = vadd.f32 0.0, %v939
    %941 = vdwg.mxu0
    %942 = vmatpush.msra.mxu0 0.0
    %943 = vmatpush.msra.mxu0 0.0
    %944 = vmatpush.msra.mxu0 0.0
    %945 = vmatpush.msra.mxu0 0.0
    %946 = vmatpush.msra.mxu0 0.0
    %947 = vmatpush.msra.mxu0 0.0
    %948 = vmatpush.msra.mxu0 0.0
    %949 = vmatpush.msra.mxu0 0.0
    %950 = vmatpush.msra.mxu0 0.0
    %951 = vmatpush.msra.mxu0 0.0
    %952 = vmatpush.msra.mxu0 0.0
    %953 = vmatpush.msra.mxu0 0.0
    %954 = vmatpush.msra.mxu0 0.0
    %955 = vmatpush.msra.mxu0 0.0
    %956 = vmatpush.msra.mxu0 %v228
    %957 = vmatpush.msra.mxu0 %v909
    %958 = vmatmul.f32.gmra.mxu0 %v914
    %v959 = vpop.f32.mrf.mxu0
    %v960 = vadd.f32 0.0, %v959
    %961 = vmatmul.f32.gmra.mxu0 %v917
    %v962 = vpop.f32.mrf.mxu0
    %v963 = vadd.f32 0.0, %v962
    %964 = vdwg.mxu0
    %v965 = vadd.f32 %v937, %v793
    %v966 = vadd.f32 %v960, %v794
    %v967 = vadd.f32 %v795, %v940
    %v968 = vadd.f32 %v796, %v963
    %969 = vrot.lane.b32.xlu0 %v965, 4
    %v970 = vpop.permute.xlu0 %969
    %971 = vrot.lane.b32.xlu0 %v966, 4
    %v972 = vpop.permute.xlu0 %971
    %v973 = vsel %vm282, %v970, %v972
    %v974 = vsel %vm282, %v972, %v970
    %v975 = vmul.f32 %v974, %v62
    %v976 = vmul.f32 %v973, %v63
    %977 = vrot.lane.b32.xlu0 %v965, 2
    %v978 = vpop.permute.xlu0 %977
    %979 = vrot.lane.b32.xlu0 %v966, 2
    %v980 = vpop.permute.xlu0 %979
    %v981 = vsel %vm85, %v978, %v980
    %v982 = vsel %vm85, %v980, %v978
    %v983 = vmul.f32 %v982, %v56
    %v984 = vmul.f32 %v981, %v57
    %s985 = scalar_lea.vmem %s2, 64
    %v986 = vld [vmem:[%s985] sm:$0xff]
    %v987 = vld [vmem:[%s985 + $0x8] sm:$0xff]
    %v989 = vsel %vm297, %v986, 0
    %v992 = vsel %vm297, %v987, 0
    %994 = vmatpush.msra.mxu0 0.0
    %995 = vmatpush.msra.mxu0 0.0
    %996 = vmatpush.msra.mxu0 0.0
    %997 = vmatpush.msra.mxu0 0.0
    %998 = vmatpush.msra.mxu0 0.0
    %999 = vmatpush.msra.mxu0 0.0
    %1000 = vmatpush.msra.mxu0 0.0
    %1001 = vmatpush.msra.mxu0 0.0
    %1002 = vmatpush.msra.mxu0 0.0
    %1003 = vmatpush.msra.mxu0 0.0
    %1004 = vmatpush.msra.mxu0 0.0
    %1005 = vmatpush.msra.mxu0 0.0
    %1006 = vmatpush.msra.mxu0 %v228
    %1007 = vmatpush.msra.mxu0 %v965
    %1008 = vmatpush.msra.mxu0 %v983
    %1009 = vmatpush.msra.mxu0 %v975
    %1010 = vmatmul.f32.gmra.mxu0 %v989
    %v1011 = vpop.f32.mrf.mxu0
    %v1012 = vadd.f32 0.0, %v1011
    %1013 = vmatmul.f32.gmra.mxu0 %v992
    %v1014 = vpop.f32.mrf.mxu0
    %v1015 = vadd.f32 0.0, %v1014
    %1016 = vdwg.mxu0
    %1017 = vmatpush.msra.mxu0 0.0
    %1018 = vmatpush.msra.mxu0 0.0
    %1019 = vmatpush.msra.mxu0 0.0
    %1020 = vmatpush.msra.mxu0 0.0
    %1021 = vmatpush.msra.mxu0 0.0
    %1022 = vmatpush.msra.mxu0 0.0
    %1023 = vmatpush.msra.mxu0 0.0
    %1024 = vmatpush.msra.mxu0 0.0
    %1025 = vmatpush.msra.mxu0 0.0
    %1026 = vmatpush.msra.mxu0 0.0
    %1027 = vmatpush.msra.mxu0 0.0
    %1028 = vmatpush.msra.mxu0 0.0
    %1029 = vmatpush.msra.mxu0 %v228
    %1030 = vmatpush.msra.mxu0 %v966
    %1031 = vmatpush.msra.mxu0 %v984
    %1032 = vmatpush.msra.mxu0 %v976
    %1033 = vmatmul.f32.gmra.mxu0 %v989
    %v1034 = vpop.f32.mrf.mxu0
    %v1035 = vadd.f32 0.0, %v1034
    %1036 = vmatmul.f32.gmra.mxu0 %v992
    %v1037 = vpop.f32.mrf.mxu0
    %v1038 = vadd.f32 0.0, %v1037
    %1039 = vdwg.mxu0
    %v1040 = vtanh.pop %v1012
    %v1041 = vtanh.pop %v1035
    %v1042 = vxor.u32 %v1015, 2147483648
    %v1043 = vxor.u32 %v1038, 2147483648
    %v1044 = vmul.f32 %v1042, 1.442695
    %v1045 = vpow.pop %v1044
    %v1046 = vmul.f32 %v1043, 1.442695
    %v1047 = vpow.pop %v1046
    %v1048 = vadd.f32 %v1045, 1.0
    %v1049 = vadd.f32 %v1047, 1.0
    %v1050 = vrcp.pop %v1048
    %v1051 = vmul.f32 %v1048, %v1050
    %v1052 = vsub.f32 1.0, %v1051
    %v1053 = vmul.f32 %v1050, %v1052
    %v1054 = vadd.f32 %v1050, %v1053
    %vm1055 = vweird.f32 %v1048
    %vm1056 = vweird.f32 %v1050
    %vm1057 = vmor %vm1055, %vm1056
    %v1058 = vsel %vm1057, %v1050, %v1054
    %v1059 = vand.u32 2147483647, %v1048
    %vm1060 = vcmp.eq.f32.partialorder %v1059, 8.507059e+37
    %v1061 = vand.u32 %v1048, 2147483648
    %v1062 = vor.u32 1.1754944e-38, %v1061
    %v1063 = vsel %vm1060, %v1062, %v1058
    %v1064 = vmul.f32 1.0, %v1063
    %v1065 = vrcp.pop %v1049
    %v1066 = vmul.f32 %v1049, %v1065
    %v1067 = vsub.f32 1.0, %v1066
    %v1068 = vmul.f32 %v1065, %v1067
    %v1069 = vadd.f32 %v1065, %v1068
    %vm1070 = vweird.f32 %v1049
    %vm1071 = vweird.f32 %v1065
    %vm1072 = vmor %vm1070, %vm1071
    %v1073 = vsel %vm1072, %v1065, %v1069
    %v1074 = vand.u32 2147483647, %v1049
    %vm1075 = vcmp.eq.f32.partialorder %v1074, 8.507059e+37
    %v1076 = vand.u32 %v1049, 2147483648
    %v1077 = vor.u32 1.1754944e-38, %v1076
    %v1078 = vsel %vm1075, %v1077, %v1073
    %v1079 = vmul.f32 1.0, %v1078
    %v1080 = vmul.f32 %v1040, %v1064
    %v1081 = vmul.f32 %v1041, %v1079
    %s1082 = scalar_lea.vmem %s3, 80
    %v1083 = vld [vmem:[%s1082] sm:$0xff]
    %v1084 = vld [vmem:[%s1082 + $0x8] sm:$0x1]
    %v1086 = vsel %vm220, %v1083, 0
    %v1089 = vsel %vm220, %v1084, 0
    %1091 = vmatpush.msra.mxu0 0.0
    %1092 = vmatpush.msra.mxu0 0.0
    %1093 = vmatpush.msra.mxu0 0.0
    %1094 = vmatpush.msra.mxu0 0.0
    %1095 = vmatpush.msra.mxu0 0.0
    %1096 = vmatpush.msra.mxu0 0.0
    %1097 = vmatpush.msra.mxu0 0.0
    %1098 = vmatpush.msra.mxu0 0.0
    %1099 = vmatpush.msra.mxu0 0.0
    %1100 = vmatpush.msra.mxu0 0.0
    %1101 = vmatpush.msra.mxu0 0.0
    %1102 = vmatpush.msra.mxu0 0.0
    %1103 = vmatpush.msra.mxu0 0.0
    %1104 = vmatpush.msra.mxu0 0.0
    %1105 = vmatpush.msra.mxu0 %v228
    %1106 = vmatpush.msra.mxu0 %v1080
    %1107 = vmatmul.f32.gmra.mxu0 %v1086
    %v1108 = vpop.f32.mrf.mxu0
    %v1109 = vadd.f32 0.0, %v1108
    %1110 = vmatmul.f32.gmra.mxu0 %v1089
    %v1111 = vpop.f32.mrf.mxu0
    %v1112 = vadd.f32 0.0, %v1111
    %1113 = vdwg.mxu0
    %1114 = vmatpush.msra.mxu0 0.0
    %1115 = vmatpush.msra.mxu0 0.0
    %1116 = vmatpush.msra.mxu0 0.0
    %1117 = vmatpush.msra.mxu0 0.0
    %1118 = vmatpush.msra.mxu0 0.0
    %1119 = vmatpush.msra.mxu0 0.0
    %1120 = vmatpush.msra.mxu0 0.0
    %1121 = vmatpush.msra.mxu0 0.0
    %1122 = vmatpush.msra.mxu0 0.0
    %1123 = vmatpush.msra.mxu0 0.0
    %1124 = vmatpush.msra.mxu0 0.0
    %1125 = vmatpush.msra.mxu0 0.0
    %1126 = vmatpush.msra.mxu0 0.0
    %1127 = vmatpush.msra.mxu0 0.0
    %1128 = vmatpush.msra.mxu0 %v228
    %1129 = vmatpush.msra.mxu0 %v1081
    %1130 = vmatmul.f32.gmra.mxu0 %v1086
    %v1131 = vpop.f32.mrf.mxu0
    %v1132 = vadd.f32 0.0, %v1131
    %1133 = vmatmul.f32.gmra.mxu0 %v1089
    %v1134 = vpop.f32.mrf.mxu0
    %v1135 = vadd.f32 0.0, %v1134
    %1136 = vdwg.mxu0
    %v1137 = vadd.f32 %v1109, %v965
    %v1138 = vadd.f32 %v1132, %v966
    %v1139 = vadd.f32 %v967, %v1112
    %v1140 = vadd.f32 %v968, %v1135
    %1141 = vrot.lane.b32.xlu0 %v1137, 8
    %v1142 = vpop.permute.xlu0 %1141
    %1143 = vrot.lane.b32.xlu0 %v1138, 8
    %v1144 = vpop.permute.xlu0 %1143
    %v1145 = vsel %vm455, %v1142, %v1144
    %v1146 = vsel %vm455, %v1144, %v1142
    %v1147 = vmul.f32 %v1146, %v68
    %v1148 = vmul.f32 %v1145, %v69
    %1149 = vrot.lane.b32.xlu0 %v1137, 4
    %v1150 = vpop.permute.xlu0 %1149
    %1151 = vrot.lane.b32.xlu0 %v1138, 4
    %v1152 = vpop.permute.xlu0 %1151
    %v1153 = vsel %vm282, %v1150, %v1152
    %v1154 = vsel %vm282, %v1152, %v1150
    %v1155 = vmul.f32 %v1154, %v62
    %v1156 = vmul.f32 %v1153, %v63
    %s1157 = scalar_lea.vmem %s2, 80
    %v1158 = vld [vmem:[%s1157] sm:$0xff]
    %v1159 = vld [vmem:[%s1157 + $0x8] sm:$0xff]
    %v1161 = vsel %vm297, %v1158, 0
    %v1164 = vsel %vm297, %v1159, 0
    %1166 = vmatpush.msra.mxu0 0.0
    %1167 = vmatpush.msra.mxu0 0.0
    %1168 = vmatpush.msra.mxu0 0.0
    %1169 = vmatpush.msra.mxu0 0.0
    %1170 = vmatpush.msra.mxu0 0.0
    %1171 = vmatpush.msra.mxu0 0.0
    %1172 = vmatpush.msra.mxu0 0.0
    %1173 = vmatpush.msra.mxu0 0.0
    %1174 = vmatpush.msra.mxu0 0.0
    %1175 = vmatpush.msra.mxu0 0.0
    %1176 = vmatpush.msra.mxu0 0.0
    %1177 = vmatpush.msra.mxu0 0.0
    %1178 = vmatpush.msra.mxu0 %v228
    %1179 = vmatpush.msra.mxu0 %v1137
    %1180 = vmatpush.msra.mxu0 %v1155
    %1181 = vmatpush.msra.mxu0 %v1147
    %1182 = vmatmul.f32.gmra.mxu0 %v1161
    %v1183 = vpop.f32.mrf.mxu0
    %v1184 = vadd.f32 0.0, %v1183
    %1185 = vmatmul.f32.gmra.mxu0 %v1164
    %v1186 = vpop.f32.mrf.mxu0
    %v1187 = vadd.f32 0.0, %v1186
    %1188 = vdwg.mxu0
    %1189 = vmatpush.msra.mxu0 0.0
    %1190 = vmatpush.msra.mxu0 0.0
    %1191 = vmatpush.msra.mxu0 0.0
    %1192 = vmatpush.msra.mxu0 0.0
    %1193 = vmatpush.msra.mxu0 0.0
    %1194 = vmatpush.msra.mxu0 0.0
    %1195 = vmatpush.msra.mxu0 0.0
    %1196 = vmatpush.msra.mxu0 0.0
    %1197 = vmatpush.msra.mxu0 0.0
    %1198 = vmatpush.msra.mxu0 0.0
    %1199 = vmatpush.msra.mxu0 0.0
    %1200 = vmatpush.msra.mxu0 0.0
    %1201 = vmatpush.msra.mxu0 %v228
    %1202 = vmatpush.msra.mxu0 %v1138
    %1203 = vmatpush.msra.mxu0 %v1156
    %1204 = vmatpush.msra.mxu0 %v1148
    %1205 = vmatmul.f32.gmra.mxu0 %v1161
    %v1206 = vpop.f32.mrf.mxu0
    %v1207 = vadd.f32 0.0, %v1206
    %1208 = vmatmul.f32.gmra.mxu0 %v1164
    %v1209 = vpop.f32.mrf.mxu0
    %v1210 = vadd.f32 0.0, %v1209
    %1211 = vdwg.mxu0
    %v1212 = vtanh.pop %v1184
    %v1213 = vtanh.pop %v1207
    %v1214 = vxor.u32 %v1187, 2147483648
    %v1215 = vxor.u32 %v1210, 2147483648
    %v1216 = vmul.f32 %v1214, 1.442695
    %v1217 = vpow.pop %v1216
    %v1218 = vmul.f32 %v1215, 1.442695
    %v1219 = vpow.pop %v1218
    %v1220 = vadd.f32 %v1217, 1.0
    %v1221 = vadd.f32 %v1219, 1.0
    %v1222 = vrcp.pop %v1220
    %v1223 = vmul.f32 %v1220, %v1222
    %v1224 = vsub.f32 1.0, %v1223
    %v1225 = vmul.f32 %v1222, %v1224
    %v1226 = vadd.f32 %v1222, %v1225
    %vm1227 = vweird.f32 %v1220
    %vm1228 = vweird.f32 %v1222
    %vm1229 = vmor %vm1227, %vm1228
    %v1230 = vsel %vm1229, %v1222, %v1226
    %v1231 = vand.u32 2147483647, %v1220
    %vm1232 = vcmp.eq.f32.partialorder %v1231, 8.507059e+37
    %v1233 = vand.u32 %v1220, 2147483648
    %v1234 = vor.u32 1.1754944e-38, %v1233
    %v1235 = vsel %vm1232, %v1234, %v1230
    %v1236 = vmul.f32 1.0, %v1235
    %v1237 = vrcp.pop %v1221
    %v1238 = vmul.f32 %v1221, %v1237
    %v1239 = vsub.f32 1.0, %v1238
    %v1240 = vmul.f32 %v1237, %v1239
    %v1241 = vadd.f32 %v1237, %v1240
    %vm1242 = vweird.f32 %v1221
    %vm1243 = vweird.f32 %v1237
    %vm1244 = vmor %vm1242, %vm1243
    %v1245 = vsel %vm1244, %v1237, %v1241
    %v1246 = vand.u32 2147483647, %v1221
    %vm1247 = vcmp.eq.f32.partialorder %v1246, 8.507059e+37
    %v1248 = vand.u32 %v1221, 2147483648
    %v1249 = vor.u32 1.1754944e-38, %v1248
    %v1250 = vsel %vm1247, %v1249, %v1245
    %v1251 = vmul.f32 1.0, %v1250
    %v1252 = vmul.f32 %v1212, %v1236
    %v1253 = vmul.f32 %v1213, %v1251
    %s1254 = scalar_lea.vmem %s3, 96
    %v1255 = vld [vmem:[%s1254] sm:$0xff]
    %v1256 = vld [vmem:[%s1254 + $0x8] sm:$0x1]
    %v1258 = vsel %vm220, %v1255, 0
    %v1261 = vsel %vm220, %v1256, 0
    %1263 = vmatpush.msra.mxu0 0.0
    %1264 = vmatpush.msra.mxu0 0.0
    %1265 = vmatpush.msra.mxu0 0.0
    %1266 = vmatpush.msra.mxu0 0.0
    %1267 = vmatpush.msra.mxu0 0.0
    %1268 = vmatpush.msra.mxu0 0.0
    %1269 = vmatpush.msra.mxu0 0.0
    %1270 = vmatpush.msra.mxu0 0.0
    %1271 = vmatpush.msra.mxu0 0.0
    %1272 = vmatpush.msra.mxu0 0.0
    %1273 = vmatpush.msra.mxu0 0.0
    %1274 = vmatpush.msra.mxu0 0.0
    %1275 = vmatpush.msra.mxu0 0.0
    %1276 = vmatpush.msra.mxu0 0.0
    %1277 = vmatpush.msra.mxu0 %v228
    %1278 = vmatpush.msra.mxu0 %v1252
    %1279 = vmatmul.f32.gmra.mxu0 %v1258
    %v1280 = vpop.f32.mrf.mxu0
    %v1281 = vadd.f32 0.0, %v1280
    %1282 = vmatmul.f32.gmra.mxu0 %v1261
    %v1283 = vpop.f32.mrf.mxu0
    %v1284 = vadd.f32 0.0, %v1283
    %1285 = vdwg.mxu0
    %1286 = vmatpush.msra.mxu0 0.0
    %1287 = vmatpush.msra.mxu0 0.0
    %1288 = vmatpush.msra.mxu0 0.0
    %1289 = vmatpush.msra.mxu0 0.0
    %1290 = vmatpush.msra.mxu0 0.0
    %1291 = vmatpush.msra.mxu0 0.0
    %1292 = vmatpush.msra.mxu0 0.0
    %1293 = vmatpush.msra.mxu0 0.0
    %1294 = vmatpush.msra.mxu0 0.0
    %1295 = vmatpush.msra.mxu0 0.0
    %1296 = vmatpush.msra.mxu0 0.0
    %1297 = vmatpush.msra.mxu0 0.0
    %1298 = vmatpush.msra.mxu0 0.0
    %1299 = vmatpush.msra.mxu0 0.0
    %1300 = vmatpush.msra.mxu0 %v228
    %1301 = vmatpush.msra.mxu0 %v1253
    %1302 = vmatmul.f32.gmra.mxu0 %v1258
    %v1303 = vpop.f32.mrf.mxu0
    %v1304 = vadd.f32 0.0, %v1303
    %1305 = vmatmul.f32.gmra.mxu0 %v1261
    %v1306 = vpop.f32.mrf.mxu0
    %v1307 = vadd.f32 0.0, %v1306
    %1308 = vdwg.mxu0
    %v1309 = vadd.f32 %v1281, %v1137
    %v1310 = vadd.f32 %v1304, %v1138
    %v1311 = vadd.f32 %v1139, %v1284
    %v1312 = vadd.f32 %v1140, %v1307
    %1313 = vrot.lane.b32.xlu0 %v1309, 16
    %v1314 = vpop.permute.xlu0 %1313
    %1315 = vrot.lane.b32.xlu0 %v1310, 16
    %v1316 = vpop.permute.xlu0 %1315
    %v1317 = vsel %vm628, %v1314, %v1316
    %v1318 = vsel %vm628, %v1316, %v1314
    %v1319 = vmul.f32 %v1318, %v74
    %v1320 = vmul.f32 %v1317, %v75
    %1321 = vrot.lane.b32.xlu0 %v1309, 8
    %v1322 = vpop.permute.xlu0 %1321
    %1323 = vrot.lane.b32.xlu0 %v1310, 8
    %v1324 = vpop.permute.xlu0 %1323
    %v1325 = vsel %vm455, %v1322, %v1324
    %v1326 = vsel %vm455, %v1324, %v1322
    %v1327 = vmul.f32 %v1326, %v68
    %v1328 = vmul.f32 %v1325, %v69
    %s1329 = scalar_lea.vmem %s2, 96
    %v1330 = vld [vmem:[%s1329] sm:$0xff]
    %v1331 = vld [vmem:[%s1329 + $0x8] sm:$0xff]
    %v1333 = vsel %vm297, %v1330, 0
    %v1336 = vsel %vm297, %v1331, 0
    %1338 = vmatpush.msra.mxu0 0.0
    %1339 = vmatpush.msra.mxu0 0.0
    %1340 = vmatpush.msra.mxu0 0.0
    %1341 = vmatpush.msra.mxu0 0.0
    %1342 = vmatpush.msra.mxu0 0.0
    %1343 = vmatpush.msra.mxu0 0.0
    %1344 = vmatpush.msra.mxu0 0.0
    %1345 = vmatpush.msra.mxu0 0.0
    %1346 = vmatpush.msra.mxu0 0.0
    %1347 = vmatpush.msra.mxu0 0.0
    %1348 = vmatpush.msra.mxu0 0.0
    %1349 = vmatpush.msra.mxu0 0.0
    %1350 = vmatpush.msra.mxu0 %v228
    %1351 = vmatpush.msra.mxu0 %v1309
    %1352 = vmatpush.msra.mxu0 %v1327
    %1353 = vmatpush.msra.mxu0 %v1319
    %1354 = vmatmul.f32.gmra.mxu0 %v1333
    %v1355 = vpop.f32.mrf.mxu0
    %v1356 = vadd.f32 0.0, %v1355
    %1357 = vmatmul.f32.gmra.mxu0 %v1336
    %v1358 = vpop.f32.mrf.mxu0
    %v1359 = vadd.f32 0.0, %v1358
    %1360 = vdwg.mxu0
    %1361 = vmatpush.msra.mxu0 0.0
    %1362 = vmatpush.msra.mxu0 0.0
    %1363 = vmatpush.msra.mxu0 0.0
    %1364 = vmatpush.msra.mxu0 0.0
    %1365 = vmatpush.msra.mxu0 0.0
    %1366 = vmatpush.msra.mxu0 0.0
    %1367 = vmatpush.msra.mxu0 0.0
    %1368 = vmatpush.msra.mxu0 0.0
    %1369 = vmatpush.msra.mxu0 0.0
    %1370 = vmatpush.msra.mxu0 0.0
    %1371 = vmatpush.msra.mxu0 0.0
    %1372 = vmatpush.msra.mxu0 0.0
    %1373 = vmatpush.msra.mxu0 %v228
    %1374 = vmatpush.msra.mxu0 %v1310
    %1375 = vmatpush.msra.mxu0 %v1328
    %1376 = vmatpush.msra.mxu0 %v1320
    %1377 = vmatmul.f32.gmra.mxu0 %v1333
    %v1378 = vpop.f32.mrf.mxu0
    %v1379 = vadd.f32 0.0, %v1378
    %1380 = vmatmul.f32.gmra.mxu0 %v1336
    %v1381 = vpop.f32.mrf.mxu0
    %v1382 = vadd.f32 0.0, %v1381
    %1383 = vdwg.mxu0
    %v1384 = vtanh.pop %v1356
    %v1385 = vtanh.pop %v1379
    %v1386 = vxor.u32 %v1359, 2147483648
    %v1387 = vxor.u32 %v1382, 2147483648
    %v1388 = vmul.f32 %v1386, 1.442695
    %v1389 = vpow.pop %v1388
    %v1390 = vmul.f32 %v1387, 1.442695
    %v1391 = vpow.pop %v1390
    %v1392 = vadd.f32 %v1389, 1.0
    %v1393 = vadd.f32 %v1391, 1.0
    %v1394 = vrcp.pop %v1392
    %v1395 = vmul.f32 %v1392, %v1394
    %v1396 = vsub.f32 1.0, %v1395
    %v1397 = vmul.f32 %v1394, %v1396
    %v1398 = vadd.f32 %v1394, %v1397
    %vm1399 = vweird.f32 %v1392
    %vm1400 = vweird.f32 %v1394
    %vm1401 = vmor %vm1399, %vm1400
    %v1402 = vsel %vm1401, %v1394, %v1398
    %v1403 = vand.u32 2147483647, %v1392
    %vm1404 = vcmp.eq.f32.partialorder %v1403, 8.507059e+37
    %v1405 = vand.u32 %v1392, 2147483648
    %v1406 = vor.u32 1.1754944e-38, %v1405
    %v1407 = vsel %vm1404, %v1406, %v1402
    %v1408 = vmul.f32 1.0, %v1407
    %v1409 = vrcp.pop %v1393
    %v1410 = vmul.f32 %v1393, %v1409
    %v1411 = vsub.f32 1.0, %v1410
    %v1412 = vmul.f32 %v1409, %v1411
    %v1413 = vadd.f32 %v1409, %v1412
    %vm1414 = vweird.f32 %v1393
    %vm1415 = vweird.f32 %v1409
    %vm1416 = vmor %vm1414, %vm1415
    %v1417 = vsel %vm1416, %v1409, %v1413
    %v1418 = vand.u32 2147483647, %v1393
    %vm1419 = vcmp.eq.f32.partialorder %v1418, 8.507059e+37
    %v1420 = vand.u32 %v1393, 2147483648
    %v1421 = vor.u32 1.1754944e-38, %v1420
    %v1422 = vsel %vm1419, %v1421, %v1417
    %v1423 = vmul.f32 1.0, %v1422
    %v1424 = vmul.f32 %v1384, %v1408
    %v1425 = vmul.f32 %v1385, %v1423
    %s1426 = scalar_lea.vmem %s3, 112
    %v1427 = vld [vmem:[%s1426] sm:$0xff]
    %v1428 = vld [vmem:[%s1426 + $0x8] sm:$0x1]
    %v1430 = vsel %vm220, %v1427, 0
    %v1433 = vsel %vm220, %v1428, 0
    %1435 = vmatpush.msra.mxu0 0.0
    %1436 = vmatpush.msra.mxu0 0.0
    %1437 = vmatpush.msra.mxu0 0.0
    %1438 = vmatpush.msra.mxu0 0.0
    %1439 = vmatpush.msra.mxu0 0.0
    %1440 = vmatpush.msra.mxu0 0.0
    %1441 = vmatpush.msra.mxu0 0.0
    %1442 = vmatpush.msra.mxu0 0.0
    %1443 = vmatpush.msra.mxu0 0.0
    %1444 = vmatpush.msra.mxu0 0.0
    %1445 = vmatpush.msra.mxu0 0.0
    %1446 = vmatpush.msra.mxu0 0.0
    %1447 = vmatpush.msra.mxu0 0.0
    %1448 = vmatpush.msra.mxu0 0.0
    %1449 = vmatpush.msra.mxu0 %v228
    %1450 = vmatpush.msra.mxu0 %v1424
    %1451 = vmatmul.f32.gmra.mxu0 %v1430
    %v1452 = vpop.f32.mrf.mxu0
    %1453 = vmatmul.f32.gmra.mxu0 %v1433
    %v1454 = vpop.f32.mrf.mxu0
    %v1455 = vadd.f32 0.0, %v1454
    %1456 = vdwg.mxu0
    %1457 = vmatpush.msra.mxu0 0.0
    %1458 = vmatpush.msra.mxu0 0.0
    %1459 = vmatpush.msra.mxu0 0.0
    %1460 = vmatpush.msra.mxu0 0.0
    %1461 = vmatpush.msra.mxu0 0.0
    %1462 = vmatpush.msra.mxu0 0.0
    %1463 = vmatpush.msra.mxu0 0.0
    %1464 = vmatpush.msra.mxu0 0.0
    %1465 = vmatpush.msra.mxu0 0.0
    %1466 = vmatpush.msra.mxu0 0.0
    %1467 = vmatpush.msra.mxu0 0.0
    %1468 = vmatpush.msra.mxu0 0.0
    %1469 = vmatpush.msra.mxu0 0.0
    %1470 = vmatpush.msra.mxu0 0.0
    %1471 = vmatpush.msra.mxu0 %v228
    %1472 = vmatpush.msra.mxu0 %v1425
    %1473 = vmatmul.f32.gmra.mxu0 %v1430
    %v1474 = vpop.f32.mrf.mxu0
    %1475 = vmatmul.f32.gmra.mxu0 %v1433
    %v1476 = vpop.f32.mrf.mxu0
    %v1477 = vadd.f32 0.0, %v1476
    %1478 = vdwg.mxu0
    %v1479 = vadd.f32 %v1311, %v1455
    %v1480 = vadd.f32 %v1312, %v1477
    %v1483 = vrot.slane %v1480, 7
    %v1484 = vsel %vm105, %v1479, %v1483
    %v1486 = vlaneseq
    %vm1487 = vcmp.ge.s32.totalorder %v1486, 0
    %vm1488 = vcmp.lt.s32.totalorder %v1486, 256
    %vm1489 = vmand %vm1487, %vm1488
    %1490 = vst.msk [vmem:[#allocation2] sm:$0x3] %vm1489, %v1484
    // Predicated region
    $region18: #{tpu_custom_call.1} parent=1 // pred_check
      _
    $region19: #{tpu_custom_call.1} parent=1 // pred_check_branch
      %1492 = sbr.rel (0) target = $region21
    $region20: #{tpu_custom_call.1} parent=1 // pred_region
      %1494 = vsyncadd [#allocation3], 0
      %s1496 = sshll.u32 [#allocation2], 4
      %s1497 = int_to_ptr.vmem [resolvable:$true] %s1496
      %s1498 = sshll.u32 %s4, 4
      %s1499 = int_to_ptr.hbm [resolvable:$true] %s1498
      %1501 = dma.vmem_to_hbm [thread:$0]  %s1497, 32, %s1499, [#allocation3]
    $region21: #{tpu_custom_call.1} parent=1 // pred_fallthru
      _
    // Predicated region
    $region22: #{tpu_custom_call.1} parent=1 // pred_check
      _
    $region23: #{tpu_custom_call.1} parent=1 // pred_check_branch
      %1503 = sbr.rel (0) target = $region25
    $region24: #{tpu_custom_call.1} parent=1 // pred_region
      %1505 = dma.done [#allocation3], 32
    $region25: #{tpu_custom_call.1} parent=1 // pred_fallthru
      _
    %1506 = vsyncpa [#allocation3], 1

</llo_original>
